<compile_context>
chip_gen: v7x
topology: tpu7x:2x2x1
jax: 0.10.0
libtpu: 0.0.40
codegen_flags: <defaults>
</compile_context>

<pallas_src>
import functools

import jax
import jax.numpy as jnp
from jax.experimental import pallas as pl
from jax.experimental.pallas import tpu as pltpu

_VMEM_BUDGET = 40 * 1024 * 1024   # per-step working-set budget (v7x: 64 MiB physical)
_MIN_PALLAS_BATCH = 2048          # below this, fused XLA matches the kernel


def _mlp_kernel(x_ref, w1_ref, b1_ref, w2_ref, b2_ref, w3_ref, o_ref, *,
                compute_dtype):
    """One batch tile of relu(relu(x@W1+b1)@W2+b2) @ w3  (out_dim == 1, bias3
    folded into the wrapper epilogue)."""
    # In-kernel cast (no-op for f32): x streams from HBM in its native dtype.
    x = x_ref[...].astype(compute_dtype)                       # (bb, D)
    # fc1 + ReLU: MXU matmul, f32 accumulation, f32 epilogue (VPU).
    h1 = jnp.dot(x, w1_ref[...], preferred_element_type=jnp.float32)
    h1 = jnp.maximum(h1 + b1_ref[...], 0.0)                    # (bb, 128) f32
    # fc2 + ReLU
    h2 = jnp.dot(h1.astype(compute_dtype), w2_ref[...],
                 preferred_element_type=jnp.float32)
    h2 = jnp.maximum(h2 + b2_ref[...], 0.0)                    # (bb, 64) f32
    # fc3 on the MXU (N=1 column): the MXU has slack here, while the previous
    # VPU-mul + cross-lane reduce was saturating the vector-extended slot.
    y = jnp.dot(h2.astype(compute_dtype), w3_ref[...],
                preferred_element_type=jnp.float32)            # (bb, 1) f32
    # Lane-dense store: (1, bb) row instead of a width-1 masked column store.
    o_ref[...] = jnp.transpose(y).astype(o_ref.dtype)          # (1, bb)


def _vmem_bytes(block_b, D, H1, H2, w_bytes):
    """Per-step VMEM working set, double-buffering already included."""
    x_tiles = 2 * block_b * D * 4                       # native-f32 x blocks (2 buffers)
    o_tiles = 2 * block_b * 4                           # (1, block_b) f32 output
    weights = 2 * (D * H1 * w_bytes + H1 * 4
                   + H1 * H2 * w_bytes + H2 * 4
                   + H2 * w_bytes)                      # W1/b1/W2/b2/w3 (resident)
    live = block_b * (D * w_bytes + H1 * 4 + H2 * 4
                      + H1 * w_bytes + H2 * w_bytes + 4)  # cast x, h1, h2, y temps
    return x_tiles + o_tiles + weights + live


def _choose_block_b(B, D, H1, H2, w_bytes):
    """Largest multiple-of-128 tile <= 8192 that (a) leaves >= 4 grid steps
    when B allows it (balanced work for v7x's two TensorCores) and (b) keeps
    the per-step working set (already double-buffered) under ~40 MiB so it
    fits v7x's 64 MiB physical VMEM with headroom."""
    bb = 8192
    while bb > 128 and 4 * bb > B:
        bb //= 2
    while bb > 128 and _vmem_bytes(bb, D, H1, H2, w_bytes) > _VMEM_BUDGET:
        bb //= 2
    return max(bb, 128)


@functools.partial(jax.jit, static_argnames=("block_b", "compute_dtype"))
def _forward_pallas(x, w1, b1, w2, b2, w3, b3, *, block_b, compute_dtype):
    B, D = x.shape
    H1 = w1.shape[1]   # 128
    H2 = w2.shape[1]   # 64

    num_blocks = pl.cdiv(B, block_b)
    Bp = num_blocks * block_b

    # x stays in its native dtype (no wrapper cast); pad only a ragged tail.
    # TODO(synk): handle the ragged final block in-kernel instead of this pad.
    xs = x if Bp == B else jnp.pad(x, ((0, Bp - B), (0, 0)))

    # Tiny weights are reshaped/cast in the wrapper (negligible HBM traffic).
    w1c = w1.astype(compute_dtype)
    w2c = w2.astype(compute_dtype)
    w3c = w3.astype(compute_dtype)                    # (H2, 1) column for the MXU
    b1f = b1.reshape(1, H1).astype(jnp.float32)
    b2f = b2.reshape(1, H2).astype(jnp.float32)

    w_bytes = jnp.dtype(compute_dtype).itemsize
    est = _vmem_bytes(block_b, D, H1, H2, w_bytes)
    # Explicit limit: v5e's scoped default is only 16 MiB; cap below v7x's
    # 64 MiB physical VMEM.
    vmem_limit = int(min(max(est + (8 << 20), 24 << 20), 48 << 20))

    kernel = functools.partial(_mlp_kernel, compute_dtype=compute_dtype)
    out = pl.pallas_call(
        kernel,
        out_shape=jax.ShapeDtypeStruct((1, Bp), jnp.float32),
        grid_spec=pltpu.PrefetchScalarGridSpec(
            num_scalar_prefetch=0,
            grid=(num_blocks,),
            in_specs=[
                pl.BlockSpec((block_b, D), lambda i: (i, 0)),   # x tile (streams, native dtype)
                pl.BlockSpec((D, H1), lambda i: (0, 0)),        # W1 (resident)
                pl.BlockSpec((1, H1), lambda i: (0, 0)),        # b1
                pl.BlockSpec((H1, H2), lambda i: (0, 0)),       # W2
                pl.BlockSpec((1, H2), lambda i: (0, 0)),        # b2
                pl.BlockSpec((H2, 1), lambda i: (0, 0)),        # w3 column (MXU fc3)
            ],
            # Lane-dense output: each step writes a (1, block_b) row slice.
            out_specs=pl.BlockSpec((1, block_b), lambda i: (0, i)),
        ),
        compiler_params=pltpu.CompilerParams(
            dimension_semantics=("parallel",),
            vmem_limit_bytes=vmem_limit,
        ),
    )(xs, w1c, b1f, w2c, b2f, w3c)

    # (1, Bp) lane-dense row -> (B, 1) column; fold the scalar fc3 bias here
    # (cheaper than a padded (1,1) VMEM block inside the kernel).
    y = out[0, :B][:, None] + b3.reshape(1, -1).astype(jnp.float32)
    return y.astype(x.dtype)


@functools.partial(jax.jit, static_argnames=("compute_dtype",))
def reference_forward(x, w1, b1, w2, b2, w3, b3, compute_dtype=jnp.float32):
    """Plain-XLA forward using the same compute scheme as the kernel
    (compute_dtype matmul inputs, f32 accumulation and epilogue)."""
    cd = compute_dtype
    h1 = jnp.dot(x.astype(cd), w1.astype(cd), preferred_element_type=jnp.float32)
    h1 = jnp.maximum(h1 + b1.reshape(1, -1), 0.0)
    h2 = jnp.dot(h1.astype(cd), w2.astype(cd), preferred_element_type=jnp.float32)
    h2 = jnp.maximum(h2 + b2.reshape(1, -1), 0.0)
    y = jnp.dot(h2.astype(cd), w3.astype(cd),
                preferred_element_type=jnp.float32) + b3.reshape(1, -1)
    return y.astype(x.dtype)


def linear_regression_forward(x, w1, b1, w2, b2, w3, b3, *,
                              block_b=None, compute_dtype=jnp.float32):
    """x: (B, D). Returns (B, out_dim). Dispatches Pallas vs plain XLA with the
    same numerics on both sides of the boundary."""
    B, D = x.shape
    H1, H2, O = w1.shape[1], w2.shape[1], w3.shape[1]
    if O != 1 or B < _MIN_PALLAS_BATCH:
        # Tiny batch / general out_dim: a few-step grid kernel is mostly
        # launch + DMA overhead -- let XLA fuse it, same compute scheme.
        # TODO(synk): general out_dim>1 Pallas path (tiled-N third MXU matmul).
        return reference_forward(x, w1, b1, w2, b2, w3, b3,
                                 compute_dtype=compute_dtype)
    if block_b is None:
        block_b = _choose_block_b(B, D, H1, H2,
                                  jnp.dtype(compute_dtype).itemsize)
    if block_b % 128 != 0:
        raise ValueError("block_b must be a multiple of 128 (lane-dense output tile)")
    return _forward_pallas(x, w1, b1, w2, b2, w3, b3,
                           block_b=block_b, compute_dtype=compute_dtype)


def init_params(key, dim, out_dim=1):
    """Deterministic init matching the PyTorch module's shapes.

    PyTorch nn.Linear stores weight as (out, in); here we directly build the
    (in, out) matrices (equivalent to storing the transpose)."""
    k1, k2, k3, k4, k5, k6 = jax.random.split(key, 6)
    w1 = jax.random.normal(k1, (dim, 128), jnp.float32) * (1.0 / jnp.sqrt(dim))
    b1 = jax.random.normal(k2, (1, 128), jnp.float32) * 0.01
    w2 = jax.random.normal(k3, (128, 64), jnp.float32) * (1.0 / jnp.sqrt(128.0))
    b2 = jax.random.normal(k4, (1, 64), jnp.float32) * 0.01
    w3 = jax.random.normal(k5, (64, out_dim), jnp.float32) * (1.0 / jnp.sqrt(64.0))
    b3 = jax.random.normal(k6, (1, out_dim), jnp.float32) * 0.01
    return w1, b1, w2, b2, w3, b3


if __name__ == "__main__":
    key = jax.random.PRNGKey(0)
    kx, kp = jax.random.split(key)

    # Small but kernel-exercising shapes: B=2048 rows of D=32 features -> the
    # Pallas path runs with block_b=512 and a 4-step "parallel" grid.
    B, D, OUT = 2048, 32, 1
    x = jax.random.normal(kx, (B, D), jnp.float32)
    params = init_params(kp, D, OUT)

    # Default path: f32 weights/activations, faithful to the PyTorch module.
    y = linear_regression_forward(x, *params)
    y = jax.block_until_ready(y)
    assert y.shape == (B, OUT)
    assert bool(jnp.all(jnp.isfinite(y)))

    # Compare vs plain-XLA f32 reference. Tolerance is loose enough to cover
    # differing MXU f32 pass-decomposition between Mosaic and XLA, but tight
    # enough to catch any structural bug (layout, bias, ReLU, transpose).
    y_ref = reference_forward(x, *params)
    assert bool(jnp.allclose(y, y_ref, atol=5e-2, rtol=5e-2)), "f32 mismatch vs reference"

    # bf16-weights variant: identical, unambiguous MXU semantics on both sides
    # (exact bf16 products, f32 accumulation) -> tight tolerance.
    y_bf = linear_regression_forward(x, *params, compute_dtype=jnp.bfloat16)
    y_bf_ref = reference_forward(x, *params, compute_dtype=jnp.bfloat16)
    assert bool(jnp.allclose(y_bf, y_bf_ref, atol=5e-3, rtol=5e-3)), "bf16 mismatch vs reference"

    print("KERNEL_OK")
</pallas_src>

<mosaic_0001>
module attributes {stable_mosaic.version = 11 : i64} {
  func.func @_mlp_kernel(%arg0: i32, %arg1: memref<512x32xf32, #tpu.memory_space<vmem>>, %arg2: memref<32x128xf32, #tpu.memory_space<vmem>>, %arg3: memref<1x128xf32, #tpu.memory_space<vmem>>, %arg4: memref<128x64xf32, #tpu.memory_space<vmem>>, %arg5: memref<1x64xf32, #tpu.memory_space<vmem>>, %arg6: memref<64x1xf32, #tpu.memory_space<vmem>>, %arg7: memref<1x512xf32, #tpu.memory_space<vmem>>) attributes {dimension_semantics = [#tpu.dimension_semantics<parallel>], iteration_bounds = array<i64: 4>, scalar_prefetch = 0 : i64, scratch_operands = 0 : i64, tpu.core_type = #tpu.core_type<tc>, window_params = [{transform_indices = @transform_0, window_bounds = array<i64: 512, 32>}, {pipeline_mode = #tpu.pipeline_mode<synchronous>, transform_indices = @transform_1, window_bounds = array<i64: 32, 128>}, {pipeline_mode = #tpu.pipeline_mode<synchronous>, transform_indices = @transform_2, window_bounds = array<i64: 1, 128>}, {pipeline_mode = #tpu.pipeline_mode<synchronous>, transform_indices = @transform_3, window_bounds = array<i64: 128, 64>}, {pipeline_mode = #tpu.pipeline_mode<synchronous>, transform_indices = @transform_4, window_bounds = array<i64: 1, 64>}, {pipeline_mode = #tpu.pipeline_mode<synchronous>, transform_indices = @transform_5, window_bounds = array<i64: 64, 1>}, {transform_indices = @transform_6, window_bounds = array<i64: 1, 512>}]} {
    %c0 = arith.constant 0 : index
    %c0_0 = arith.constant 0 : index
    %0 = vector.load %arg1[%c0, %c0_0] : memref<512x32xf32, #tpu.memory_space<vmem>>, vector<512x32xf32>
    %c0_1 = arith.constant 0 : index
    %c0_2 = arith.constant 0 : index
    %1 = vector.load %arg2[%c0_1, %c0_2] : memref<32x128xf32, #tpu.memory_space<vmem>>, vector<32x128xf32>
    %cst = arith.constant dense<0.000000e+00> : vector<512x128xf32>
    %2 = tpu.matmul %0, %1, %cst {dimension_numbers = #tpu.dot_dimension_numbers<[1], [0], [0], [1], [0, 0, 1, 1], [], []>} : vector<512x32xf32>, vector<32x128xf32>, vector<512x128xf32> -> vector<512x128xf32>
    %c0_3 = arith.constant 0 : index
    %c0_4 = arith.constant 0 : index
    %3 = vector.load %arg3[%c0_3, %c0_4] : memref<1x128xf32, #tpu.memory_space<vmem>>, vector<1x128xf32>
    %4 = vector.broadcast %3 : vector<1x128xf32> to vector<512x128xf32>
    %5 = arith.addf %2, %4 : vector<512x128xf32>
    %cst_5 = arith.constant 0.000000e+00 : f32
    %6 = vector.broadcast %cst_5 : f32 to vector<512x128xf32>
    %7 = arith.maximumf %5, %6 : vector<512x128xf32>
    %c0_6 = arith.constant 0 : index
    %c0_7 = arith.constant 0 : index
    %8 = vector.load %arg4[%c0_6, %c0_7] : memref<128x64xf32, #tpu.memory_space<vmem>>, vector<128x64xf32>
    %cst_8 = arith.constant dense<0.000000e+00> : vector<512x64xf32>
    %9 = tpu.matmul %7, %8, %cst_8 {dimension_numbers = #tpu.dot_dimension_numbers<[1], [0], [0], [1], [0, 0, 1, 1], [], []>} : vector<512x128xf32>, vector<128x64xf32>, vector<512x64xf32> -> vector<512x64xf32>
    %c0_9 = arith.constant 0 : index
    %c0_10 = arith.constant 0 : index
    %10 = vector.load %arg5[%c0_9, %c0_10] : memref<1x64xf32, #tpu.memory_space<vmem>>, vector<1x64xf32>
    %11 = vector.broadcast %10 : vector<1x64xf32> to vector<512x64xf32>
    %12 = arith.addf %9, %11 : vector<512x64xf32>
    %cst_11 = arith.constant 0.000000e+00 : f32
    %13 = vector.broadcast %cst_11 : f32 to vector<512x64xf32>
    %14 = arith.maximumf %12, %13 : vector<512x64xf32>
    %c0_12 = arith.constant 0 : index
    %c0_13 = arith.constant 0 : index
    %15 = vector.load %arg6[%c0_12, %c0_13] : memref<64x1xf32, #tpu.memory_space<vmem>>, vector<64x1xf32>
    %cst_14 = arith.constant dense<0.000000e+00> : vector<512x1xf32>
    %16 = tpu.matmul %14, %15, %cst_14 {dimension_numbers = #tpu.dot_dimension_numbers<[1], [0], [0], [1], [0, 0, 1, 1], [], []>} : vector<512x64xf32>, vector<64x1xf32>, vector<512x1xf32> -> vector<512x1xf32>
    %17 = tpu.transpose %16, [1, 0] : vector<512x1xf32> -> vector<1x512xf32>
    %c0_15 = arith.constant 0 : index
    %c0_16 = arith.constant 0 : index
    %18 = vector.load %arg7[%c0_15, %c0_16] : memref<1x512xf32, #tpu.memory_space<vmem>>, vector<1x512xf32>
    tpu.vector_store %arg7[%c0_15, %c0_16], %17 {strides = array<i32>} : memref<1x512xf32, #tpu.memory_space<vmem>>, vector<1x512xf32>,
    return
  }
  func.func @transform_0(%arg0: i32) -> (i32, i32) {
    %c0_i32 = arith.constant 0 : i32
    %c0_i32_0 = arith.constant 0 : i32
    return %arg0, %c0_i32 : i32, i32
  }
  func.func @transform_1(%arg0: i32) -> (i32, i32) {
    %c0_i32 = arith.constant 0 : i32
    %c0_i32_0 = arith.constant 0 : i32
    %c0_i32_1 = arith.constant 0 : i32
    return %c0_i32, %c0_i32_0 : i32, i32
  }
  func.func @transform_2(%arg0: i32) -> (i32, i32) {
    %c0_i32 = arith.constant 0 : i32
    %c0_i32_0 = arith.constant 0 : i32
    %c0_i32_1 = arith.constant 0 : i32
    return %c0_i32, %c0_i32_0 : i32, i32
  }
  func.func @transform_3(%arg0: i32) -> (i32, i32) {
    %c0_i32 = arith.constant 0 : i32
    %c0_i32_0 = arith.constant 0 : i32
    %c0_i32_1 = arith.constant 0 : i32
    return %c0_i32, %c0_i32_0 : i32, i32
  }
  func.func @transform_4(%arg0: i32) -> (i32, i32) {
    %c0_i32 = arith.constant 0 : i32
    %c0_i32_0 = arith.constant 0 : i32
    %c0_i32_1 = arith.constant 0 : i32
    return %c0_i32, %c0_i32_0 : i32, i32
  }
  func.func @transform_5(%arg0: i32) -> (i32, i32) {
    %c0_i32 = arith.constant 0 : i32
    %c0_i32_0 = arith.constant 0 : i32
    %c0_i32_1 = arith.constant 0 : i32
    return %c0_i32, %c0_i32_0 : i32, i32
  }
  func.func @transform_6(%arg0: i32) -> (i32, i32) {
    %c0_i32 = arith.constant 0 : i32
    %c0_i32_0 = arith.constant 0 : i32
    return %c0_i32, %arg0 : i32, i32
  }
}

</mosaic_0001>

<llo_original>
// kernel: _forward_pallas.1
$region0: #{_forward_pallas.1}
  #allocation0 [shape = 'u32[]', space=smem, size = 0x4, offset = 0x4, fixed_abs, tag = 'smem constant byte address 0x4 - core index']
  #allocation1 [shape = 'u32[144,128]{1,0:T(1,128)}', space=vmem, size = 0x12000, scoped, tag = 'internal scratch']
  %s0 = inlined_call_operand.vmem [shape: f32[2048,32], index: 0, kind: input, shape index: {}]
  %s1 = inlined_call_operand.vmem [shape: f32[32,128], index: 1, kind: input, shape index: {}]
  %s2 = inlined_call_operand.vmem [shape: f32[1,128], index: 2, kind: input, shape index: {}]
  %s3 = inlined_call_operand.vmem [shape: f32[128,64], index: 3, kind: input, shape index: {}]
  %s4 = inlined_call_operand.vmem [shape: f32[1,64], index: 4, kind: input, shape index: {}]
  %s5 = inlined_call_operand.vmem [shape: f32[64,1], index: 5, kind: input, shape index: {}]
  %s6 = inlined_call_operand.vmem [shape: f32[1,2048], index: 6, kind: output, shape index: {}]
  %s7 = sld [smem:[#allocation0]]
  $region57: #{_forward_pallas.1} parent=0
    _
  %s9 = ssub.s32 1, %s7
  %s10 = scalar_select 0, %s9, %s7
  loop: start=0, step=1, limit=6
  $region2: #{_forward_pallas.1} parent=0 // loop_pre_header
    _
  $region3: #{_forward_pallas.1} parent=0 // loop_header
    %s12 = sphi 0, %s16
    %p13 = scmp.ge.s32.totalorder %s12, 6
    %s22 = sphi 0, %s24
    %s25 = sphi 0, %s22
    %s26 = sphi 0, %s25
    %s42 = sphi 0, %s26
    %s46 = sphi 0, %s46
    %s48 = sphi 0, %s46
    %s49 = sphi 0, %s48
    %s63 = sphi 0, %s49
    %s67 = sphi 0, %s67
    %s69 = sphi 0, %s67
    %s70 = sphi 0, %s69
    %s84 = sphi 0, %s70
    %s88 = sphi 0, %s88
    %s90 = sphi 0, %s88
    %s91 = sphi 0, %s90
    %s105 = sphi 0, %s91
    %s109 = sphi 0, %s109
    %s111 = sphi 0, %s109
    %s112 = sphi 0, %s111
    %s126 = sphi 0, %s112
    %s130 = sphi 0, %s130
    %s132 = sphi 0, %s130
    %s133 = sphi 0, %s132
    %s147 = sphi 0, %s133
    %s153 = sphi 0, %s155
    %s156 = sphi 0, %s153
    %s157 = sphi 0, %s156
    %s173 = sphi 0, %s157
  $region4: #{_forward_pallas.1} parent=0 // loop_header_branch
    %15 = sbr.rel (%p13) target = $region8
  $region5: #{_forward_pallas.1} parent=0 // loop_body
    %s17 = ssub.s32 %s12, 1
    %s18 = ssub.s32 %s12, 2
    %s19 = sadd.s32 %s12, 1
    %s20 = ssub.s32 %s12, %s19
    %p21 = scmp.eq.s32.totalorder %s20, 0
    %s23 = sadd.s32 %s22, 1
    %s24 = scalar_select %p21, %s22, %s23
    %p27 = pneg %p21
    %p28 = scmp.eq.s32.totalorder %s12, 3
    %p29 = por %p27, %p28
    %p30 = scmp.ne.s32.totalorder %s22, %s25
    %p31 = scmp.eq.s32.totalorder %s12, 0
    %p32 = por %p30, %p31
    %p33 = scmp.ne.s32.totalorder %s22, %s25
    %p34 = scmp.eq.s32.totalorder %s17, 3
    %p35 = por %p33, %p34
    %p36 = scmp.ne.s32.totalorder %s25, %s26
    %p37 = scmp.eq.s32.totalorder %s17, 0
    %p38 = por %p36, %p37
    %p39 = scmp.ne.s32.totalorder %s25, %s26
    %p40 = scmp.eq.s32.totalorder %s18, 3
    %p41 = por %p39, %p40
    %p43 = scmp.ne.s32.totalorder %s26, %s42
    %p44 = scmp.eq.s32.totalorder %s18, 0
    %p45 = por %p43, %p44
    %s47 = sadd.s32 %s46, 1
    %p50 = scmp.eq.s32.totalorder %s12, 3
    %p51 = scmp.ne.s32.totalorder %s46, %s48
    %p52 = scmp.eq.s32.totalorder %s12, 0
    %p53 = por %p51, %p52
    %p54 = scmp.ne.s32.totalorder %s46, %s48
    %p55 = scmp.eq.s32.totalorder %s17, 3
    %p56 = por %p54, %p55
    %p57 = scmp.ne.s32.totalorder %s48, %s49
    %p58 = scmp.eq.s32.totalorder %s17, 0
    %p59 = por %p57, %p58
    %p60 = scmp.ne.s32.totalorder %s48, %s49
    %p61 = scmp.eq.s32.totalorder %s18, 3
    %p62 = por %p60, %p61
    %p64 = scmp.ne.s32.totalorder %s49, %s63
    %p65 = scmp.eq.s32.totalorder %s18, 0
    %p66 = por %p64, %p65
    %s68 = sadd.s32 %s67, 1
    %p71 = scmp.eq.s32.totalorder %s12, 3
    %p72 = scmp.ne.s32.totalorder %s67, %s69
    %p73 = scmp.eq.s32.totalorder %s12, 0
    %p74 = por %p72, %p73
    %p75 = scmp.ne.s32.totalorder %s67, %s69
    %p76 = scmp.eq.s32.totalorder %s17, 3
    %p77 = por %p75, %p76
    %p78 = scmp.ne.s32.totalorder %s69, %s70
    %p79 = scmp.eq.s32.totalorder %s17, 0
    %p80 = por %p78, %p79
    %p81 = scmp.ne.s32.totalorder %s69, %s70
    %p82 = scmp.eq.s32.totalorder %s18, 3
    %p83 = por %p81, %p82
    %p85 = scmp.ne.s32.totalorder %s70, %s84
    %p86 = scmp.eq.s32.totalorder %s18, 0
    %p87 = por %p85, %p86
    %s89 = sadd.s32 %s88, 1
    %p92 = scmp.eq.s32.totalorder %s12, 3
    %p93 = scmp.ne.s32.totalorder %s88, %s90
    %p94 = scmp.eq.s32.totalorder %s12, 0
    %p95 = por %p93, %p94
    %p96 = scmp.ne.s32.totalorder %s88, %s90
    %p97 = scmp.eq.s32.totalorder %s17, 3
    %p98 = por %p96, %p97
    %p99 = scmp.ne.s32.totalorder %s90, %s91
    %p100 = scmp.eq.s32.totalorder %s17, 0
    %p101 = por %p99, %p100
    %p102 = scmp.ne.s32.totalorder %s90, %s91
    %p103 = scmp.eq.s32.totalorder %s18, 3
    %p104 = por %p102, %p103
    %p106 = scmp.ne.s32.totalorder %s91, %s105
    %p107 = scmp.eq.s32.totalorder %s18, 0
    %p108 = por %p106, %p107
    %s110 = sadd.s32 %s109, 1
    %p113 = scmp.eq.s32.totalorder %s12, 3
    %p114 = scmp.ne.s32.totalorder %s109, %s111
    %p115 = scmp.eq.s32.totalorder %s12, 0
    %p116 = por %p114, %p115
    %p117 = scmp.ne.s32.totalorder %s109, %s111
    %p118 = scmp.eq.s32.totalorder %s17, 3
    %p119 = por %p117, %p118
    %p120 = scmp.ne.s32.totalorder %s111, %s112
    %p121 = scmp.eq.s32.totalorder %s17, 0
    %p122 = por %p120, %p121
    %p123 = scmp.ne.s32.totalorder %s111, %s112
    %p124 = scmp.eq.s32.totalorder %s18, 3
    %p125 = por %p123, %p124
    %p127 = scmp.ne.s32.totalorder %s112, %s126
    %p128 = scmp.eq.s32.totalorder %s18, 0
    %p129 = por %p127, %p128
    %s131 = sadd.s32 %s130, 1
    %p134 = scmp.eq.s32.totalorder %s12, 3
    %p135 = scmp.ne.s32.totalorder %s130, %s132
    %p136 = scmp.eq.s32.totalorder %s12, 0
    %p137 = por %p135, %p136
    %p138 = scmp.ne.s32.totalorder %s130, %s132
    %p139 = scmp.eq.s32.totalorder %s17, 3
    %p140 = por %p138, %p139
    %p141 = scmp.ne.s32.totalorder %s132, %s133
    %p142 = scmp.eq.s32.totalorder %s17, 0
    %p143 = por %p141, %p142
    %p144 = scmp.ne.s32.totalorder %s132, %s133
    %p145 = scmp.eq.s32.totalorder %s18, 3
    %p146 = por %p144, %p145
    %p148 = scmp.ne.s32.totalorder %s133, %s147
    %p149 = scmp.eq.s32.totalorder %s18, 0
    %p150 = por %p148, %p149
    %s151 = ssub.s32 %s12, %s19
    %p152 = scmp.eq.s32.totalorder %s151, 0
    %s154 = sadd.s32 %s153, 1
    %s155 = scalar_select %p152, %s153, %s154
    %p158 = pneg %p152
    %p159 = scmp.eq.s32.totalorder %s12, 3
    %p160 = por %p158, %p159
    %p161 = scmp.ne.s32.totalorder %s153, %s156
    %p162 = scmp.eq.s32.totalorder %s12, 0
    %p163 = por %p161, %p162
    %p164 = scmp.ne.s32.totalorder %s153, %s156
    %p165 = scmp.eq.s32.totalorder %s17, 3
    %p166 = por %p164, %p165
    %p167 = scmp.ne.s32.totalorder %s156, %s157
    %p168 = scmp.eq.s32.totalorder %s17, 0
    %p169 = por %p167, %p168
    %p170 = scmp.ne.s32.totalorder %s156, %s157
    %p171 = scmp.eq.s32.totalorder %s18, 3
    %p172 = por %p170, %p171
    %p174 = scmp.ne.s32.totalorder %s157, %s173
    %p175 = scmp.eq.s32.totalorder %s18, 0
    %p176 = por %p174, %p175
    %p177 = scmp.le.s32.totalorder 1, %s12
    %p178 = scmp.lt.s32.totalorder %s12, 5
    %p179 = pnand %p177, %p178
    %p180 = pneg %p179
    // Predicated region
    $region9: #{_forward_pallas.1} parent=5 // pred_check
      _
    $region10: #{_forward_pallas.1} parent=5 // pred_check_branch
      %182 = sbr.rel (%p179) target = $region12
    $region11: #{_forward_pallas.1} parent=5 // pred_region
      %s183 = ssub.s32 %s12, 1
      // Predicated region
      $region13: #{_forward_pallas.1} parent=11 // pred_check
        %p184 = pneg %p59
      $region14: #{_forward_pallas.1} parent=11 // pred_check_branch
        %186 = sbr.rel (%p184) target = $region16
      $region15: #{_forward_pallas.1} parent=11 // pred_region
        _
      $region16: #{_forward_pallas.1} parent=11 // pred_fallthru
        _
      // Predicated region
      $region17: #{_forward_pallas.1} parent=11 // pred_check
        %p187 = pneg %p80
      $region18: #{_forward_pallas.1} parent=11 // pred_check_branch
        %189 = sbr.rel (%p187) target = $region20
      $region19: #{_forward_pallas.1} parent=11 // pred_region
        _
      $region20: #{_forward_pallas.1} parent=11 // pred_fallthru
        _
      // Predicated region
      $region21: #{_forward_pallas.1} parent=11 // pred_check
        %p190 = pneg %p101
      $region22: #{_forward_pallas.1} parent=11 // pred_check_branch
        %192 = sbr.rel (%p190) target = $region24
      $region23: #{_forward_pallas.1} parent=11 // pred_region
        _
      $region24: #{_forward_pallas.1} parent=11 // pred_fallthru
        _
      // Predicated region
      $region25: #{_forward_pallas.1} parent=11 // pred_check
        %p193 = pneg %p122
      $region26: #{_forward_pallas.1} parent=11 // pred_check_branch
        %195 = sbr.rel (%p193) target = $region28
      $region27: #{_forward_pallas.1} parent=11 // pred_region
        _
      $region28: #{_forward_pallas.1} parent=11 // pred_fallthru
        _
      // Predicated region
      $region29: #{_forward_pallas.1} parent=11 // pred_check
        %p196 = pneg %p143
      $region30: #{_forward_pallas.1} parent=11 // pred_check_branch
        %198 = sbr.rel (%p196) target = $region32
      $region31: #{_forward_pallas.1} parent=11 // pred_region
        _
      $region32: #{_forward_pallas.1} parent=11 // pred_fallthru
        _
    $region12: #{_forward_pallas.1} parent=5 // pred_fallthru
      _
    %p199 = scmp.lt.s32.totalorder %s12, 4
    // Predicated region
    $region33: #{_forward_pallas.1} parent=5 // pred_check
      %p200 = pneg %p199
    $region34: #{_forward_pallas.1} parent=5 // pred_check_branch
      %202 = sbr.rel (%p200) target = $region36
    $region35: #{_forward_pallas.1} parent=5 // pred_region
      // Predicated region
      $region37: #{_forward_pallas.1} parent=35 // pred_check
        %p203 = pneg %p32
      $region38: #{_forward_pallas.1} parent=35 // pred_check_branch
        %205 = sbr.rel (%p203) target = $region40
      $region39: #{_forward_pallas.1} parent=35 // pred_region
        %s206 = smul.u32 64, %s12
        %p207 = scmp.lt.s32.totalorder %s206, 255
        %s208 = scalar_select %p207, %s206, 255
        %s209 = smul.addr %s208, 8
        %s210 = scalar_lea.vmem %s0, %s209
        %s211 = smul.u32 64, %s12
      $region40: #{_forward_pallas.1} parent=35 // pred_fallthru
        _
    $region36: #{_forward_pallas.1} parent=5 // pred_fallthru
      _
    %p212 = scmp.le.s32.totalorder 1, %s12
    %p213 = scmp.lt.s32.totalorder %s12, 5
    %p214 = pnand %p212, %p213
    %p215 = pneg %p214
    // Predicated region
    $region41: #{_forward_pallas.1} parent=5 // pred_check
      _
    $region42: #{_forward_pallas.1} parent=5 // pred_check_branch
      %217 = sbr.rel (%p214) target = $region44
    $region43: #{_forward_pallas.1} parent=5 // pred_region
      %s218 = ssub.s32 %s12, 1
      %s219 = smul.u32 64, %s17
      %p220 = scmp.lt.s32.totalorder %s219, 255
      %s221 = scalar_select %p220, %s219, 255
      %s222 = smul.addr %s221, 8
      %s223 = scalar_lea.vmem %s0, %s222
      %p224 = pneg %p38
      %p225 = pneg %p35
      %p226 = pneg %p59
      %p227 = pneg %p56
      %p228 = pneg %p80
      %p229 = pneg %p77
      %p230 = pneg %p101
      %p231 = pneg %p98
      %p232 = pneg %p122
      %p233 = pneg %p119
      %p234 = pneg %p143
      %p235 = pneg %p140
      %p236 = pneg %p169
      %p237 = pneg %p166
      %s238 = smul.u32 4, %s17
      %p239 = scmp.lt.s32.totalorder %s238, 15
      %s240 = scalar_select %p239, %s238, 15
      %s241 = scalar_lea.vmem %s6, %s240
      %s242 = smul.u32 64, %s17
      %p243 = scmp.lt.s32.totalorder %s242, 255
      %s244 = scalar_select %p243, %s242, 255
      %s245 = smul.addr %s244, 8
      %s246 = scalar_lea.vmem %s0, %s245
      %s247 = smul.u32 64, %s17
      %s248 = smul.u32 4, %s17
      %p249 = scmp.lt.s32.totalorder %s248, 15
      %s250 = scalar_select %p249, %s248, 15
      %s251 = scalar_lea.vmem %s6, %s250
      %s252 = smul.u32 4, %s17
      %v253 = vld [vmem:[%s246] sm:$0xff]
      %v254 = vld [vmem:[%s246 + $0x8] sm:$0xff]
      %v255 = vld [vmem:[%s246 + $0x10] sm:$0xff]
      %v256 = vld [vmem:[%s246 + $0x18] sm:$0xff]
      %v257 = vld [vmem:[%s246 + $0x20] sm:$0xff]
      %v258 = vld [vmem:[%s246 + $0x28] sm:$0xff]
      %v259 = vld [vmem:[%s246 + $0x30] sm:$0xff]
      %v260 = vld [vmem:[%s246 + $0x38] sm:$0xff]
      %v261 = vld [vmem:[%s246 + $0x40] sm:$0xff]
      %v262 = vld [vmem:[%s246 + $0x48] sm:$0xff]
      %v263 = vld [vmem:[%s246 + $0x50] sm:$0xff]
      %v264 = vld [vmem:[%s246 + $0x58] sm:$0xff]
      %v265 = vld [vmem:[%s246 + $0x60] sm:$0xff]
      %v266 = vld [vmem:[%s246 + $0x68] sm:$0xff]
      %v267 = vld [vmem:[%s246 + $0x70] sm:$0xff]
      %v268 = vld [vmem:[%s246 + $0x78] sm:$0xff]
      %v269 = vld [vmem:[%s246 + $0x80] sm:$0xff]
      %v270 = vld [vmem:[%s246 + $0x88] sm:$0xff]
      %v271 = vld [vmem:[%s246 + $0x90] sm:$0xff]
      %v272 = vld [vmem:[%s246 + $0x98] sm:$0xff]
      %v273 = vld [vmem:[%s246 + $0xa0] sm:$0xff]
      %v274 = vld [vmem:[%s246 + $0xa8] sm:$0xff]
      %v275 = vld [vmem:[%s246 + $0xb0] sm:$0xff]
      %v276 = vld [vmem:[%s246 + $0xb8] sm:$0xff]
      %v277 = vld [vmem:[%s246 + $0xc0] sm:$0xff]
      %v278 = vld [vmem:[%s246 + $0xc8] sm:$0xff]
      %v279 = vld [vmem:[%s246 + $0xd0] sm:$0xff]
      %v280 = vld [vmem:[%s246 + $0xd8] sm:$0xff]
      %v281 = vld [vmem:[%s246 + $0xe0] sm:$0xff]
      %v282 = vld [vmem:[%s246 + $0xe8] sm:$0xff]
      %v283 = vld [vmem:[%s246 + $0xf0] sm:$0xff]
      %v284 = vld [vmem:[%s246 + $0xf8] sm:$0xff]
      %v285 = vld [vmem:[%s246 + $0x100] sm:$0xff]
      %v286 = vld [vmem:[%s246 + $0x108] sm:$0xff]
      %v287 = vld [vmem:[%s246 + $0x110] sm:$0xff]
      %v288 = vld [vmem:[%s246 + $0x118] sm:$0xff]
      %v289 = vld [vmem:[%s246 + $0x120] sm:$0xff]
      %v290 = vld [vmem:[%s246 + $0x128] sm:$0xff]
      %v291 = vld [vmem:[%s246 + $0x130] sm:$0xff]
      %v292 = vld [vmem:[%s246 + $0x138] sm:$0xff]
      %v293 = vld [vmem:[%s246 + $0x140] sm:$0xff]
      %v294 = vld [vmem:[%s246 + $0x148] sm:$0xff]
      %v295 = vld [vmem:[%s246 + $0x150] sm:$0xff]
      %v296 = vld [vmem:[%s246 + $0x158] sm:$0xff]
      %v297 = vld [vmem:[%s246 + $0x160] sm:$0xff]
      %v298 = vld [vmem:[%s246 + $0x168] sm:$0xff]
      %v299 = vld [vmem:[%s246 + $0x170] sm:$0xff]
      %v300 = vld [vmem:[%s246 + $0x178] sm:$0xff]
      %v301 = vld [vmem:[%s246 + $0x180] sm:$0xff]
      %v302 = vld [vmem:[%s246 + $0x188] sm:$0xff]
      %v303 = vld [vmem:[%s246 + $0x190] sm:$0xff]
      %v304 = vld [vmem:[%s246 + $0x198] sm:$0xff]
      %v305 = vld [vmem:[%s246 + $0x1a0] sm:$0xff]
      %v306 = vld [vmem:[%s246 + $0x1a8] sm:$0xff]
      %v307 = vld [vmem:[%s246 + $0x1b0] sm:$0xff]
      %v308 = vld [vmem:[%s246 + $0x1b8] sm:$0xff]
      %v309 = vld [vmem:[%s246 + $0x1c0] sm:$0xff]
      %v310 = vld [vmem:[%s246 + $0x1c8] sm:$0xff]
      %v311 = vld [vmem:[%s246 + $0x1d0] sm:$0xff]
      %v312 = vld [vmem:[%s246 + $0x1d8] sm:$0xff]
      %v313 = vld [vmem:[%s246 + $0x1e0] sm:$0xff]
      %v314 = vld [vmem:[%s246 + $0x1e8] sm:$0xff]
      %v315 = vld [vmem:[%s246 + $0x1f0] sm:$0xff]
      %v316 = vld [vmem:[%s246 + $0x1f8] sm:$0xff]
      %v317 = vld [vmem:[%s1] sm:$0xff]
      %v318 = vld [vmem:[%s1 + $0x8] sm:$0xff]
      %v319 = vld [vmem:[%s1 + $0x10] sm:$0xff]
      %v320 = vld [vmem:[%s1 + $0x18] sm:$0xff]
      %v321 = vld [vmem:[%s2] sm:$0x1]
      %v323 = vlaneseq
      %v324 = vshrl.u32 %v323, 7
      %v325 = vsub.s32 0, %v324
      %v326 = vrot.slane %v321, %v325
      %vm328 = vcmask 261120
      %v330 = vsel %vm328, %v253, 0
      %v333 = vsel %vm328, %v254, 0
      %v336 = vsel %vm328, %v255, 0
      %v339 = vsel %vm328, %v256, 0
      %v342 = vsel %vm328, %v257, 0
      %v345 = vsel %vm328, %v258, 0
      %v348 = vsel %vm328, %v259, 0
      %v351 = vsel %vm328, %v260, 0
      %v354 = vsel %vm328, %v261, 0
      %v357 = vsel %vm328, %v262, 0
      %v360 = vsel %vm328, %v263, 0
      %v363 = vsel %vm328, %v264, 0
      %v366 = vsel %vm328, %v265, 0
      %v369 = vsel %vm328, %v266, 0
      %v372 = vsel %vm328, %v267, 0
      %v375 = vsel %vm328, %v268, 0
      %v378 = vsel %vm328, %v269, 0
      %v381 = vsel %vm328, %v270, 0
      %v384 = vsel %vm328, %v271, 0
      %v387 = vsel %vm328, %v272, 0
      %v390 = vsel %vm328, %v273, 0
      %v393 = vsel %vm328, %v274, 0
      %v396 = vsel %vm328, %v275, 0
      %v399 = vsel %vm328, %v276, 0
      %v402 = vsel %vm328, %v277, 0
      %v405 = vsel %vm328, %v278, 0
      %v408 = vsel %vm328, %v279, 0
      %v411 = vsel %vm328, %v280, 0
      %v414 = vsel %vm328, %v281, 0
      %v417 = vsel %vm328, %v282, 0
      %v420 = vsel %vm328, %v283, 0
      %v423 = vsel %vm328, %v284, 0
      %v426 = vsel %vm328, %v285, 0
      %v429 = vsel %vm328, %v286, 0
      %v432 = vsel %vm328, %v287, 0
      %v435 = vsel %vm328, %v288, 0
      %v438 = vsel %vm328, %v289, 0
      %v441 = vsel %vm328, %v290, 0
      %v444 = vsel %vm328, %v291, 0
      %v447 = vsel %vm328, %v292, 0
      %v450 = vsel %vm328, %v293, 0
      %v453 = vsel %vm328, %v294, 0
      %v456 = vsel %vm328, %v295, 0
      %v459 = vsel %vm328, %v296, 0
      %v462 = vsel %vm328, %v297, 0
      %v465 = vsel %vm328, %v298, 0
      %v468 = vsel %vm328, %v299, 0
      %v471 = vsel %vm328, %v300, 0
      %v474 = vsel %vm328, %v301, 0
      %v477 = vsel %vm328, %v302, 0
      %v480 = vsel %vm328, %v303, 0
      %v483 = vsel %vm328, %v304, 0
      %v486 = vsel %vm328, %v305, 0
      %v489 = vsel %vm328, %v306, 0
      %v492 = vsel %vm328, %v307, 0
      %v495 = vsel %vm328, %v308, 0
      %v498 = vsel %vm328, %v309, 0
      %v501 = vsel %vm328, %v310, 0
      %v504 = vsel %vm328, %v311, 0
      %v507 = vsel %vm328, %v312, 0
      %v510 = vsel %vm328, %v313, 0
      %v513 = vsel %vm328, %v314, 0
      %v516 = vsel %vm328, %v315, 0
      %v519 = vsel %vm328, %v316, 0
      %521 = vmatprep.subr.mxu0 0.0
      %522 = vmatpush1.msra.mxu0 %v317
      %523 = vmatprep.subr.mxu0 0.0
      %524 = vmatpush1.msra.mxu0 %v318
      %525 = vmatprep.subr.mxu0 0.0
      %526 = vmatpush1.msra.mxu0 %v319
      %527 = vmatprep.subr.mxu0 0.0
      %528 = vmatpush1.msra.mxu0 %v320
      %529 = vmatprep.subr.mxu0 0.0
      %530 = vmatpush1.msra.mxu0 0.0
      %531 = vmatprep.subr.mxu0 0.0
      %532 = vmatpush1.msra.mxu0 0.0
      %533 = vmatprep.subr.mxu0 0.0
      %534 = vmatpush1.msra.mxu0 0.0
      %535 = vmatprep.subr.mxu0 0.0
      %536 = vmatpush1.msra.mxu0 0.0
      %537 = vmatprep.subr.mxu0 0.0
      %538 = vmatpush1.msra.mxu0 0.0
      %539 = vmatprep.subr.mxu0 0.0
      %540 = vmatpush1.msra.mxu0 0.0
      %541 = vmatprep.subr.mxu0 0.0
      %542 = vmatpush1.msra.mxu0 0.0
      %543 = vmatprep.subr.mxu0 0.0
      %544 = vmatpush1.msra.mxu0 0.0
      %545 = vmatprep.subr.mxu0 0.0
      %546 = vmatpush1.msra.mxu0 0.0
      %547 = vmatprep.subr.mxu0 0.0
      %548 = vmatpush1.msra.mxu0 0.0
      %549 = vmatprep.subr.mxu0 0.0
      %550 = vmatpush1.msra.mxu0 0.0
      %551 = vmatprep.subr.mxu0 0.0
      %552 = vmatpush1.msra.mxu0 0.0
      %553 = vmatprep.subr.mxu0 0.0
      %554 = vmatpush1.msra.mxu0 0.0
      %555 = vmatprep.subr.mxu0 0.0
      %556 = vmatpush1.msra.mxu0 0.0
      %557 = vmatprep.subr.mxu0 0.0
      %558 = vmatpush1.msra.mxu0 0.0
      %559 = vmatprep.subr.mxu0 0.0
      %560 = vmatpush1.msra.mxu0 0.0
      %561 = vmatprep.subr.mxu0 0.0
      %562 = vmatpush1.msra.mxu0 0.0
      %563 = vmatprep.subr.mxu0 0.0
      %564 = vmatpush1.msra.mxu0 0.0
      %565 = vmatprep.subr.mxu0 0.0
      %566 = vmatpush1.msra.mxu0 0.0
      %567 = vmatprep.subr.mxu0 0.0
      %568 = vmatpush1.msra.mxu0 0.0
      %569 = vmatprep.subr.mxu0 0.0
      %570 = vmatpush1.msra.mxu0 0.0
      %571 = vmatprep.subr.mxu0 0.0
      %572 = vmatpush1.msra.mxu0 0.0
      %573 = vmatprep.subr.mxu0 0.0
      %574 = vmatpush1.msra.mxu0 0.0
      %575 = vmatprep.subr.mxu0 0.0
      %576 = vmatpush1.msra.mxu0 0.0
      %577 = vmatprep.subr.mxu0 0.0
      %578 = vmatpush1.msra.mxu0 0.0
      %579 = vmatprep.subr.mxu0 0.0
      %580 = vmatpush1.msra.mxu0 0.0
      %581 = vmatprep.subr.mxu0 0.0
      %582 = vmatpush1.msra.mxu0 0.0
      %583 = vmatprep.subr.mxu0 0.0
      %584 = vmatpush1.msra.mxu0 0.0
      %585 = vmatprep.mubr.f32.mxu0 0.0
      %586 = vmatmul.mubr.f32.gmra.mrb[0].mxu0 %v330
      %v587 = vpop.f32.mrb[0].mxu0
      %v588 = vadd.f32 %v326, %v587
      %v589 = vpop.f32.mrb[0].mxu0
      %590 = vmatprep.mubr.f32.mxu0 0.0
      %591 = vmatmul.mubr.f32.gmra.mrb[0].mxu0 %v333
      %v592 = vpop.f32.mrb[0].mxu0
      %v593 = vadd.f32 %v326, %v592
      %v594 = vpop.f32.mrb[0].mxu0
      %595 = vmatprep.mubr.f32.mxu0 0.0
      %596 = vmatmul.mubr.f32.gmra.mrb[0].mxu0 %v336
      %v597 = vpop.f32.mrb[0].mxu0
      %v598 = vadd.f32 %v326, %v597
      %v599 = vpop.f32.mrb[0].mxu0
      %600 = vmatprep.mubr.f32.mxu0 0.0
      %601 = vmatmul.mubr.f32.gmra.mrb[0].mxu0 %v339
      %v602 = vpop.f32.mrb[0].mxu0
      %v603 = vadd.f32 %v326, %v602
      %v604 = vpop.f32.mrb[0].mxu0
      %605 = vmatprep.mubr.f32.mxu0 0.0
      %606 = vmatmul.mubr.f32.gmra.mrb[0].mxu0 %v342
      %v607 = vpop.f32.mrb[0].mxu0
      %v608 = vadd.f32 %v326, %v607
      %v609 = vpop.f32.mrb[0].mxu0
      %610 = vmatprep.mubr.f32.mxu0 0.0
      %611 = vmatmul.mubr.f32.gmra.mrb[0].mxu0 %v345
      %v612 = vpop.f32.mrb[0].mxu0
      %v613 = vadd.f32 %v326, %v612
      %v614 = vpop.f32.mrb[0].mxu0
      %615 = vmatprep.mubr.f32.mxu0 0.0
      %616 = vmatmul.mubr.f32.gmra.mrb[0].mxu0 %v348
      %v617 = vpop.f32.mrb[0].mxu0
      %v618 = vadd.f32 %v326, %v617
      %v619 = vpop.f32.mrb[0].mxu0
      %620 = vmatprep.mubr.f32.mxu0 0.0
      %621 = vmatmul.mubr.f32.gmra.mrb[0].mxu0 %v351
      %v622 = vpop.f32.mrb[0].mxu0
      %v623 = vadd.f32 %v326, %v622
      %v624 = vpop.f32.mrb[0].mxu0
      %625 = vmatprep.mubr.f32.mxu0 0.0
      %626 = vmatmul.mubr.f32.gmra.mrb[0].mxu0 %v354
      %v627 = vpop.f32.mrb[0].mxu0
      %v628 = vadd.f32 %v326, %v627
      %v629 = vpop.f32.mrb[0].mxu0
      %630 = vmatprep.mubr.f32.mxu0 0.0
      %631 = vmatmul.mubr.f32.gmra.mrb[0].mxu0 %v357
      %v632 = vpop.f32.mrb[0].mxu0
      %v633 = vadd.f32 %v326, %v632
      %v634 = vpop.f32.mrb[0].mxu0
      %635 = vmatprep.mubr.f32.mxu0 0.0
      %636 = vmatmul.mubr.f32.gmra.mrb[0].mxu0 %v360
      %v637 = vpop.f32.mrb[0].mxu0
      %v638 = vadd.f32 %v326, %v637
      %v639 = vpop.f32.mrb[0].mxu0
      %640 = vmatprep.mubr.f32.mxu0 0.0
      %641 = vmatmul.mubr.f32.gmra.mrb[0].mxu0 %v363
      %v642 = vpop.f32.mrb[0].mxu0
      %v643 = vadd.f32 %v326, %v642
      %v644 = vpop.f32.mrb[0].mxu0
      %645 = vmatprep.mubr.f32.mxu0 0.0
      %646 = vmatmul.mubr.f32.gmra.mrb[0].mxu0 %v366
      %v647 = vpop.f32.mrb[0].mxu0
      %v648 = vadd.f32 %v326, %v647
      %v649 = vpop.f32.mrb[0].mxu0
      %650 = vmatprep.mubr.f32.mxu0 0.0
      %651 = vmatmul.mubr.f32.gmra.mrb[0].mxu0 %v369
      %v652 = vpop.f32.mrb[0].mxu0
      %v653 = vadd.f32 %v326, %v652
      %v654 = vpop.f32.mrb[0].mxu0
      %655 = vmatprep.mubr.f32.mxu0 0.0
      %656 = vmatmul.mubr.f32.gmra.mrb[0].mxu0 %v372
      %v657 = vpop.f32.mrb[0].mxu0
      %v658 = vadd.f32 %v326, %v657
      %v659 = vpop.f32.mrb[0].mxu0
      %660 = vmatprep.mubr.f32.mxu0 0.0
      %661 = vmatmul.mubr.f32.gmra.mrb[0].mxu0 %v375
      %v662 = vpop.f32.mrb[0].mxu0
      %v663 = vadd.f32 %v326, %v662
      %v664 = vpop.f32.mrb[0].mxu0
      %665 = vmatprep.mubr.f32.mxu0 0.0
      %666 = vmatmul.mubr.f32.gmra.mrb[0].mxu0 %v378
      %v667 = vpop.f32.mrb[0].mxu0
      %v668 = vadd.f32 %v326, %v667
      %v669 = vpop.f32.mrb[0].mxu0
      %670 = vmatprep.mubr.f32.mxu0 0.0
      %671 = vmatmul.mubr.f32.gmra.mrb[0].mxu0 %v381
      %v672 = vpop.f32.mrb[0].mxu0
      %v673 = vadd.f32 %v326, %v672
      %v674 = vpop.f32.mrb[0].mxu0
      %675 = vmatprep.mubr.f32.mxu0 0.0
      %676 = vmatmul.mubr.f32.gmra.mrb[0].mxu0 %v384
      %v677 = vpop.f32.mrb[0].mxu0
      %v678 = vadd.f32 %v326, %v677
      %v679 = vpop.f32.mrb[0].mxu0
      %680 = vmatprep.mubr.f32.mxu0 0.0
      %681 = vmatmul.mubr.f32.gmra.mrb[0].mxu0 %v387
      %v682 = vpop.f32.mrb[0].mxu0
      %v683 = vadd.f32 %v326, %v682
      %v684 = vpop.f32.mrb[0].mxu0
      %685 = vmatprep.mubr.f32.mxu0 0.0
      %686 = vmatmul.mubr.f32.gmra.mrb[0].mxu0 %v390
      %v687 = vpop.f32.mrb[0].mxu0
      %v688 = vadd.f32 %v326, %v687
      %v689 = vpop.f32.mrb[0].mxu0
      %690 = vmatprep.mubr.f32.mxu0 0.0
      %691 = vmatmul.mubr.f32.gmra.mrb[0].mxu0 %v393
      %v692 = vpop.f32.mrb[0].mxu0
      %v693 = vadd.f32 %v326, %v692
      %v694 = vpop.f32.mrb[0].mxu0
      %695 = vmatprep.mubr.f32.mxu0 0.0
      %696 = vmatmul.mubr.f32.gmra.mrb[0].mxu0 %v396
      %v697 = vpop.f32.mrb[0].mxu0
      %v698 = vadd.f32 %v326, %v697
      %v699 = vpop.f32.mrb[0].mxu0
      %700 = vmatprep.mubr.f32.mxu0 0.0
      %701 = vmatmul.mubr.f32.gmra.mrb[0].mxu0 %v399
      %v702 = vpop.f32.mrb[0].mxu0
      %v703 = vadd.f32 %v326, %v702
      %v704 = vpop.f32.mrb[0].mxu0
      %705 = vmatprep.mubr.f32.mxu0 0.0
      %706 = vmatmul.mubr.f32.gmra.mrb[0].mxu0 %v402
      %v707 = vpop.f32.mrb[0].mxu0
      %v708 = vadd.f32 %v326, %v707
      %v709 = vpop.f32.mrb[0].mxu0
      %710 = vmatprep.mubr.f32.mxu0 0.0
      %711 = vmatmul.mubr.f32.gmra.mrb[0].mxu0 %v405
      %v712 = vpop.f32.mrb[0].mxu0
      %v713 = vadd.f32 %v326, %v712
      %v714 = vpop.f32.mrb[0].mxu0
      %715 = vmatprep.mubr.f32.mxu0 0.0
      %716 = vmatmul.mubr.f32.gmra.mrb[0].mxu0 %v408
      %v717 = vpop.f32.mrb[0].mxu0
      %v718 = vadd.f32 %v326, %v717
      %v719 = vpop.f32.mrb[0].mxu0
      %720 = vmatprep.mubr.f32.mxu0 0.0
      %721 = vmatmul.mubr.f32.gmra.mrb[0].mxu0 %v411
      %v722 = vpop.f32.mrb[0].mxu0
      %v723 = vadd.f32 %v326, %v722
      %v724 = vpop.f32.mrb[0].mxu0
      %725 = vmatprep.mubr.f32.mxu0 0.0
      %726 = vmatmul.mubr.f32.gmra.mrb[0].mxu0 %v414
      %v727 = vpop.f32.mrb[0].mxu0
      %v728 = vadd.f32 %v326, %v727
      %v729 = vpop.f32.mrb[0].mxu0
      %730 = vmatprep.mubr.f32.mxu0 0.0
      %731 = vmatmul.mubr.f32.gmra.mrb[0].mxu0 %v417
      %v732 = vpop.f32.mrb[0].mxu0
      %v733 = vadd.f32 %v326, %v732
      %v734 = vpop.f32.mrb[0].mxu0
      %735 = vmatprep.mubr.f32.mxu0 0.0
      %736 = vmatmul.mubr.f32.gmra.mrb[0].mxu0 %v420
      %v737 = vpop.f32.mrb[0].mxu0
      %v738 = vadd.f32 %v326, %v737
      %v739 = vpop.f32.mrb[0].mxu0
      %740 = vmatprep.mubr.f32.mxu0 0.0
      %741 = vmatmul.mubr.f32.gmra.mrb[0].mxu0 %v423
      %v742 = vpop.f32.mrb[0].mxu0
      %v743 = vadd.f32 %v326, %v742
      %v744 = vpop.f32.mrb[0].mxu0
      %745 = vmatprep.mubr.f32.mxu0 0.0
      %746 = vmatmul.mubr.f32.gmra.mrb[0].mxu0 %v426
      %v747 = vpop.f32.mrb[0].mxu0
      %v748 = vadd.f32 %v326, %v747
      %v749 = vpop.f32.mrb[0].mxu0
      %750 = vmatprep.mubr.f32.mxu0 0.0
      %751 = vmatmul.mubr.f32.gmra.mrb[0].mxu0 %v429
      %v752 = vpop.f32.mrb[0].mxu0
      %v753 = vadd.f32 %v326, %v752
      %v754 = vpop.f32.mrb[0].mxu0
      %755 = vmatprep.mubr.f32.mxu0 0.0
      %756 = vmatmul.mubr.f32.gmra.mrb[0].mxu0 %v432
      %v757 = vpop.f32.mrb[0].mxu0
      %v758 = vadd.f32 %v326, %v757
      %v759 = vpop.f32.mrb[0].mxu0
      %760 = vmatprep.mubr.f32.mxu0 0.0
      %761 = vmatmul.mubr.f32.gmra.mrb[0].mxu0 %v435
      %v762 = vpop.f32.mrb[0].mxu0
      %v763 = vadd.f32 %v326, %v762
      %v764 = vpop.f32.mrb[0].mxu0
      %765 = vmatprep.mubr.f32.mxu0 0.0
      %766 = vmatmul.mubr.f32.gmra.mrb[0].mxu0 %v438
      %v767 = vpop.f32.mrb[0].mxu0
      %v768 = vadd.f32 %v326, %v767
      %v769 = vpop.f32.mrb[0].mxu0
      %770 = vmatprep.mubr.f32.mxu0 0.0
      %771 = vmatmul.mubr.f32.gmra.mrb[0].mxu0 %v441
      %v772 = vpop.f32.mrb[0].mxu0
      %v773 = vadd.f32 %v326, %v772
      %v774 = vpop.f32.mrb[0].mxu0
      %775 = vmatprep.mubr.f32.mxu0 0.0
      %776 = vmatmul.mubr.f32.gmra.mrb[0].mxu0 %v444
      %v777 = vpop.f32.mrb[0].mxu0
      %v778 = vadd.f32 %v326, %v777
      %v779 = vpop.f32.mrb[0].mxu0
      %780 = vmatprep.mubr.f32.mxu0 0.0
      %781 = vmatmul.mubr.f32.gmra.mrb[0].mxu0 %v447
      %v782 = vpop.f32.mrb[0].mxu0
      %v783 = vadd.f32 %v326, %v782
      %v784 = vpop.f32.mrb[0].mxu0
      %785 = vmatprep.mubr.f32.mxu0 0.0
      %786 = vmatmul.mubr.f32.gmra.mrb[0].mxu0 %v450
      %v787 = vpop.f32.mrb[0].mxu0
      %v788 = vadd.f32 %v326, %v787
      %v789 = vpop.f32.mrb[0].mxu0
      %790 = vmatprep.mubr.f32.mxu0 0.0
      %791 = vmatmul.mubr.f32.gmra.mrb[0].mxu0 %v453
      %v792 = vpop.f32.mrb[0].mxu0
      %v793 = vadd.f32 %v326, %v792
      %v794 = vpop.f32.mrb[0].mxu0
      %795 = vmatprep.mubr.f32.mxu0 0.0
      %796 = vmatmul.mubr.f32.gmra.mrb[0].mxu0 %v456
      %v797 = vpop.f32.mrb[0].mxu0
      %v798 = vadd.f32 %v326, %v797
      %v799 = vpop.f32.mrb[0].mxu0
      %800 = vmatprep.mubr.f32.mxu0 0.0
      %801 = vmatmul.mubr.f32.gmra.mrb[0].mxu0 %v459
      %v802 = vpop.f32.mrb[0].mxu0
      %v803 = vadd.f32 %v326, %v802
      %v804 = vpop.f32.mrb[0].mxu0
      %805 = vmatprep.mubr.f32.mxu0 0.0
      %806 = vmatmul.mubr.f32.gmra.mrb[0].mxu0 %v462
      %v807 = vpop.f32.mrb[0].mxu0
      %v808 = vadd.f32 %v326, %v807
      %v809 = vpop.f32.mrb[0].mxu0
      %810 = vmatprep.mubr.f32.mxu0 0.0
      %811 = vmatmul.mubr.f32.gmra.mrb[0].mxu0 %v465
      %v812 = vpop.f32.mrb[0].mxu0
      %v813 = vadd.f32 %v326, %v812
      %v814 = vpop.f32.mrb[0].mxu0
      %815 = vmatprep.mubr.f32.mxu0 0.0
      %816 = vmatmul.mubr.f32.gmra.mrb[0].mxu0 %v468
      %v817 = vpop.f32.mrb[0].mxu0
      %v818 = vadd.f32 %v326, %v817
      %v819 = vpop.f32.mrb[0].mxu0
      %820 = vmatprep.mubr.f32.mxu0 0.0
      %821 = vmatmul.mubr.f32.gmra.mrb[0].mxu0 %v471
      %v822 = vpop.f32.mrb[0].mxu0
      %v823 = vadd.f32 %v326, %v822
      %v824 = vpop.f32.mrb[0].mxu0
      %825 = vmatprep.mubr.f32.mxu0 0.0
      %826 = vmatmul.mubr.f32.gmra.mrb[0].mxu0 %v474
      %v827 = vpop.f32.mrb[0].mxu0
      %v828 = vadd.f32 %v326, %v827
      %v829 = vpop.f32.mrb[0].mxu0
      %830 = vmatprep.mubr.f32.mxu0 0.0
      %831 = vmatmul.mubr.f32.gmra.mrb[0].mxu0 %v477
      %v832 = vpop.f32.mrb[0].mxu0
      %v833 = vadd.f32 %v326, %v832
      %v834 = vpop.f32.mrb[0].mxu0
      %835 = vmatprep.mubr.f32.mxu0 0.0
      %836 = vmatmul.mubr.f32.gmra.mrb[0].mxu0 %v480
      %v837 = vpop.f32.mrb[0].mxu0
      %v838 = vadd.f32 %v326, %v837
      %v839 = vpop.f32.mrb[0].mxu0
      %840 = vmatprep.mubr.f32.mxu0 0.0
      %841 = vmatmul.mubr.f32.gmra.mrb[0].mxu0 %v483
      %v842 = vpop.f32.mrb[0].mxu0
      %v843 = vadd.f32 %v326, %v842
      %v844 = vpop.f32.mrb[0].mxu0
      %845 = vmatprep.mubr.f32.mxu0 0.0
      %846 = vmatmul.mubr.f32.gmra.mrb[0].mxu0 %v486
      %v847 = vpop.f32.mrb[0].mxu0
      %v848 = vadd.f32 %v326, %v847
      %v849 = vpop.f32.mrb[0].mxu0
      %850 = vmatprep.mubr.f32.mxu0 0.0
      %851 = vmatmul.mubr.f32.gmra.mrb[0].mxu0 %v489
      %v852 = vpop.f32.mrb[0].mxu0
      %v853 = vadd.f32 %v326, %v852
      %v854 = vpop.f32.mrb[0].mxu0
      %855 = vmatprep.mubr.f32.mxu0 0.0
      %856 = vmatmul.mubr.f32.gmra.mrb[0].mxu0 %v492
      %v857 = vpop.f32.mrb[0].mxu0
      %v858 = vadd.f32 %v326, %v857
      %v859 = vpop.f32.mrb[0].mxu0
      %860 = vmatprep.mubr.f32.mxu0 0.0
      %861 = vmatmul.mubr.f32.gmra.mrb[0].mxu0 %v495
      %v862 = vpop.f32.mrb[0].mxu0
      %v863 = vadd.f32 %v326, %v862
      %v864 = vpop.f32.mrb[0].mxu0
      %865 = vmatprep.mubr.f32.mxu0 0.0
      %866 = vmatmul.mubr.f32.gmra.mrb[0].mxu0 %v498
      %v867 = vpop.f32.mrb[0].mxu0
      %v868 = vadd.f32 %v326, %v867
      %v869 = vpop.f32.mrb[0].mxu0
      %870 = vmatprep.mubr.f32.mxu0 0.0
      %871 = vmatmul.mubr.f32.gmra.mrb[0].mxu0 %v501
      %v872 = vpop.f32.mrb[0].mxu0
      %v873 = vadd.f32 %v326, %v872
      %v874 = vpop.f32.mrb[0].mxu0
      %875 = vmatprep.mubr.f32.mxu0 0.0
      %876 = vmatmul.mubr.f32.gmra.mrb[0].mxu0 %v504
      %v877 = vpop.f32.mrb[0].mxu0
      %v878 = vadd.f32 %v326, %v877
      %v879 = vpop.f32.mrb[0].mxu0
      %880 = vmatprep.mubr.f32.mxu0 0.0
      %881 = vmatmul.mubr.f32.gmra.mrb[0].mxu0 %v507
      %v882 = vpop.f32.mrb[0].mxu0
      %v883 = vadd.f32 %v326, %v882
      %v884 = vpop.f32.mrb[0].mxu0
      %885 = vmatprep.mubr.f32.mxu0 0.0
      %886 = vmatmul.mubr.f32.gmra.mrb[0].mxu0 %v510
      %v887 = vpop.f32.mrb[0].mxu0
      %v888 = vadd.f32 %v326, %v887
      %v889 = vpop.f32.mrb[0].mxu0
      %890 = vmatprep.mubr.f32.mxu0 0.0
      %891 = vmatmul.mubr.f32.gmra.mrb[0].mxu0 %v513
      %v892 = vpop.f32.mrb[0].mxu0
      %v893 = vadd.f32 %v326, %v892
      %v894 = vpop.f32.mrb[0].mxu0
      %895 = vmatprep.mubr.f32.mxu0 0.0
      %896 = vmatmul.mubr.f32.gmra.mrb[0].mxu0 %v516
      %v897 = vpop.f32.mrb[0].mxu0
      %v898 = vadd.f32 %v326, %v897
      %v899 = vpop.f32.mrb[0].mxu0
      %900 = vmatprep.mubr.f32.mxu0 0.0
      %901 = vmatmul.mubr.f32.gmra.mrb[0].mxu0 %v519
      %v902 = vpop.f32.mrb[0].mxu0
      %v903 = vadd.f32 %v326, %v902
      %v904 = vpop.f32.mrb[0].mxu0
      %905 = vdwg.mxu0
      %v906 = vmax.f32 %v588, 0.0
      %v907 = vmax.f32 %v593, 0.0
      %v908 = vmax.f32 %v598, 0.0
      %v909 = vmax.f32 %v603, 0.0
      %v910 = vmax.f32 %v608, 0.0
      %v911 = vmax.f32 %v613, 0.0
      %v912 = vmax.f32 %v618, 0.0
      %v913 = vmax.f32 %v623, 0.0
      %v914 = vmax.f32 %v628, 0.0
      %v915 = vmax.f32 %v633, 0.0
      %v916 = vmax.f32 %v638, 0.0
      %v917 = vmax.f32 %v643, 0.0
      %v918 = vmax.f32 %v648, 0.0
      %v919 = vmax.f32 %v653, 0.0
      %v920 = vmax.f32 %v658, 0.0
      %v921 = vmax.f32 %v663, 0.0
      %v922 = vmax.f32 %v668, 0.0
      %v923 = vmax.f32 %v673, 0.0
      %v924 = vmax.f32 %v678, 0.0
      %v925 = vmax.f32 %v683, 0.0
      %v926 = vmax.f32 %v688, 0.0
      %v927 = vmax.f32 %v693, 0.0
      %v928 = vmax.f32 %v698, 0.0
      %v929 = vmax.f32 %v703, 0.0
      %v930 = vmax.f32 %v708, 0.0
      %v931 = vmax.f32 %v713, 0.0
      %v932 = vmax.f32 %v718, 0.0
      %v933 = vmax.f32 %v723, 0.0
      %v934 = vmax.f32 %v728, 0.0
      %v935 = vmax.f32 %v733, 0.0
      %v936 = vmax.f32 %v738, 0.0
      %v937 = vmax.f32 %v743, 0.0
      %v938 = vmax.f32 %v748, 0.0
      %v939 = vmax.f32 %v753, 0.0
      %v940 = vmax.f32 %v758, 0.0
      %v941 = vmax.f32 %v763, 0.0
      %v942 = vmax.f32 %v768, 0.0
      %v943 = vmax.f32 %v773, 0.0
      %v944 = vmax.f32 %v778, 0.0
      %v945 = vmax.f32 %v783, 0.0
      %v946 = vmax.f32 %v788, 0.0
      %v947 = vmax.f32 %v793, 0.0
      %v948 = vmax.f32 %v798, 0.0
      %v949 = vmax.f32 %v803, 0.0
      %v950 = vmax.f32 %v808, 0.0
      %v951 = vmax.f32 %v813, 0.0
      %v952 = vmax.f32 %v818, 0.0
      %v953 = vmax.f32 %v823, 0.0
      %v954 = vmax.f32 %v828, 0.0
      %v955 = vmax.f32 %v833, 0.0
      %v956 = vmax.f32 %v838, 0.0
      %v957 = vmax.f32 %v843, 0.0
      %v958 = vmax.f32 %v848, 0.0
      %v959 = vmax.f32 %v853, 0.0
      %v960 = vmax.f32 %v858, 0.0
      %v961 = vmax.f32 %v863, 0.0
      %v962 = vmax.f32 %v868, 0.0
      %v963 = vmax.f32 %v873, 0.0
      %v964 = vmax.f32 %v878, 0.0
      %v965 = vmax.f32 %v883, 0.0
      %v966 = vmax.f32 %v888, 0.0
      %v967 = vmax.f32 %v893, 0.0
      %v968 = vmax.f32 %v898, 0.0
      %v969 = vmax.f32 %v903, 0.0
      %v970 = vld [vmem:[%s3] sm:$0xff]
      %v971 = vld [vmem:[%s3 + $0x8] sm:$0xff]
      %v972 = vld [vmem:[%s3 + $0x10] sm:$0xff]
      %v973 = vld [vmem:[%s3 + $0x18] sm:$0xff]
      %v974 = vld [vmem:[%s3 + $0x20] sm:$0xff]
      %v975 = vld [vmem:[%s3 + $0x28] sm:$0xff]
      %v976 = vld [vmem:[%s3 + $0x30] sm:$0xff]
      %v977 = vld [vmem:[%s3 + $0x38] sm:$0xff]
      %v978 = vld [vmem:[%s3 + $0x40] sm:$0xff]
      %v979 = vld [vmem:[%s3 + $0x48] sm:$0xff]
      %v980 = vld [vmem:[%s3 + $0x50] sm:$0xff]
      %v981 = vld [vmem:[%s3 + $0x58] sm:$0xff]
      %v982 = vld [vmem:[%s3 + $0x60] sm:$0xff]
      %v983 = vld [vmem:[%s3 + $0x68] sm:$0xff]
      %v984 = vld [vmem:[%s3 + $0x70] sm:$0xff]
      %v985 = vld [vmem:[%s3 + $0x78] sm:$0xff]
      %v986 = vld [vmem:[%s4] sm:$0x1]
      %v988 = vlaneseq
      %v989 = vshrl.u32 %v988, 7
      %v990 = vsub.s32 0, %v989
      %v991 = vrot.slane %v986, %v990
      %993 = vmatprep.subr.mxu0 0.0
      %994 = vmatpush1.msra.mxu0 %v970
      %995 = vmatprep.subr.mxu0 0.0
      %996 = vmatpush1.msra.mxu0 %v971
      %997 = vmatprep.subr.mxu0 0.0
      %998 = vmatpush1.msra.mxu0 %v972
      %999 = vmatprep.subr.mxu0 0.0
      %1000 = vmatpush1.msra.mxu0 %v973
      %1001 = vmatprep.subr.mxu0 0.0
      %1002 = vmatpush1.msra.mxu0 %v974
      %1003 = vmatprep.subr.mxu0 0.0
      %1004 = vmatpush1.msra.mxu0 %v975
      %1005 = vmatprep.subr.mxu0 0.0
      %1006 = vmatpush1.msra.mxu0 %v976
      %1007 = vmatprep.subr.mxu0 0.0
      %1008 = vmatpush1.msra.mxu0 %v977
      %1009 = vmatprep.subr.mxu0 0.0
      %1010 = vmatpush1.msra.mxu0 %v978
      %1011 = vmatprep.subr.mxu0 0.0
      %1012 = vmatpush1.msra.mxu0 %v979
      %1013 = vmatprep.subr.mxu0 0.0
      %1014 = vmatpush1.msra.mxu0 %v980
      %1015 = vmatprep.subr.mxu0 0.0
      %1016 = vmatpush1.msra.mxu0 %v981
      %1017 = vmatprep.subr.mxu0 0.0
      %1018 = vmatpush1.msra.mxu0 %v982
      %1019 = vmatprep.subr.mxu0 0.0
      %1020 = vmatpush1.msra.mxu0 %v983
      %1021 = vmatprep.subr.mxu0 0.0
      %1022 = vmatpush1.msra.mxu0 %v984
      %1023 = vmatprep.subr.mxu0 0.0
      %1024 = vmatpush1.msra.mxu0 %v985
      %1025 = vmatprep.subr.mxu0 0.0
      %1026 = vmatpush1.msra.mxu0 0.0
      %1027 = vmatprep.subr.mxu0 0.0
      %1028 = vmatpush1.msra.mxu0 0.0
      %1029 = vmatprep.subr.mxu0 0.0
      %1030 = vmatpush1.msra.mxu0 0.0
      %1031 = vmatprep.subr.mxu0 0.0
      %1032 = vmatpush1.msra.mxu0 0.0
      %1033 = vmatprep.subr.mxu0 0.0
      %1034 = vmatpush1.msra.mxu0 0.0
      %1035 = vmatprep.subr.mxu0 0.0
      %1036 = vmatpush1.msra.mxu0 0.0
      %1037 = vmatprep.subr.mxu0 0.0
      %1038 = vmatpush1.msra.mxu0 0.0
      %1039 = vmatprep.subr.mxu0 0.0
      %1040 = vmatpush1.msra.mxu0 0.0
      %1041 = vmatprep.subr.mxu0 0.0
      %1042 = vmatpush1.msra.mxu0 0.0
      %1043 = vmatprep.subr.mxu0 0.0
      %1044 = vmatpush1.msra.mxu0 0.0
      %1045 = vmatprep.subr.mxu0 0.0
      %1046 = vmatpush1.msra.mxu0 0.0
      %1047 = vmatprep.subr.mxu0 0.0
      %1048 = vmatpush1.msra.mxu0 0.0
      %1049 = vmatprep.subr.mxu0 0.0
      %1050 = vmatpush1.msra.mxu0 0.0
      %1051 = vmatprep.subr.mxu0 0.0
      %1052 = vmatpush1.msra.mxu0 0.0
      %1053 = vmatprep.subr.mxu0 0.0
      %1054 = vmatpush1.msra.mxu0 0.0
      %1055 = vmatprep.subr.mxu0 0.0
      %1056 = vmatpush1.msra.mxu0 0.0
      %1057 = vmatprep.mubr.f32.mxu0 0.0
      %1058 = vmatmul.mubr.f32.gmra.mrb[0].mxu0 %v906
      %v1059 = vpop.f32.mrb[0].mxu0
      %v1060 = vadd.f32 %v991, %v1059
      %v1061 = vpop.f32.mrb[0].mxu0
      %1062 = vmatprep.mubr.f32.mxu0 0.0
      %1063 = vmatmul.mubr.f32.gmra.mrb[0].mxu0 %v907
      %v1064 = vpop.f32.mrb[0].mxu0
      %v1065 = vadd.f32 %v991, %v1064
      %v1066 = vpop.f32.mrb[0].mxu0
      %1067 = vmatprep.mubr.f32.mxu0 0.0
      %1068 = vmatmul.mubr.f32.gmra.mrb[0].mxu0 %v908
      %v1069 = vpop.f32.mrb[0].mxu0
      %v1070 = vadd.f32 %v991, %v1069
      %v1071 = vpop.f32.mrb[0].mxu0
      %1072 = vmatprep.mubr.f32.mxu0 0.0
      %1073 = vmatmul.mubr.f32.gmra.mrb[0].mxu0 %v909
      %v1074 = vpop.f32.mrb[0].mxu0
      %v1075 = vadd.f32 %v991, %v1074
      %v1076 = vpop.f32.mrb[0].mxu0
      %1077 = vmatprep.mubr.f32.mxu0 0.0
      %1078 = vmatmul.mubr.f32.gmra.mrb[0].mxu0 %v910
      %v1079 = vpop.f32.mrb[0].mxu0
      %v1080 = vadd.f32 %v991, %v1079
      %v1081 = vpop.f32.mrb[0].mxu0
      %1082 = vmatprep.mubr.f32.mxu0 0.0
      %1083 = vmatmul.mubr.f32.gmra.mrb[0].mxu0 %v911
      %v1084 = vpop.f32.mrb[0].mxu0
      %v1085 = vadd.f32 %v991, %v1084
      %v1086 = vpop.f32.mrb[0].mxu0
      %1087 = vmatprep.mubr.f32.mxu0 0.0
      %1088 = vmatmul.mubr.f32.gmra.mrb[0].mxu0 %v912
      %v1089 = vpop.f32.mrb[0].mxu0
      %v1090 = vadd.f32 %v991, %v1089
      %v1091 = vpop.f32.mrb[0].mxu0
      %1092 = vmatprep.mubr.f32.mxu0 0.0
      %1093 = vmatmul.mubr.f32.gmra.mrb[0].mxu0 %v913
      %v1094 = vpop.f32.mrb[0].mxu0
      %v1095 = vadd.f32 %v991, %v1094
      %v1096 = vpop.f32.mrb[0].mxu0
      %1097 = vmatprep.mubr.f32.mxu0 0.0
      %1098 = vmatmul.mubr.f32.gmra.mrb[0].mxu0 %v914
      %v1099 = vpop.f32.mrb[0].mxu0
      %v1100 = vadd.f32 %v991, %v1099
      %v1101 = vpop.f32.mrb[0].mxu0
      %1102 = vmatprep.mubr.f32.mxu0 0.0
      %1103 = vmatmul.mubr.f32.gmra.mrb[0].mxu0 %v915
      %v1104 = vpop.f32.mrb[0].mxu0
      %v1105 = vadd.f32 %v991, %v1104
      %v1106 = vpop.f32.mrb[0].mxu0
      %1107 = vmatprep.mubr.f32.mxu0 0.0
      %1108 = vmatmul.mubr.f32.gmra.mrb[0].mxu0 %v916
      %v1109 = vpop.f32.mrb[0].mxu0
      %v1110 = vadd.f32 %v991, %v1109
      %v1111 = vpop.f32.mrb[0].mxu0
      %1112 = vmatprep.mubr.f32.mxu0 0.0
      %1113 = vmatmul.mubr.f32.gmra.mrb[0].mxu0 %v917
      %v1114 = vpop.f32.mrb[0].mxu0
      %v1115 = vadd.f32 %v991, %v1114
      %v1116 = vpop.f32.mrb[0].mxu0
      %1117 = vmatprep.mubr.f32.mxu0 0.0
      %1118 = vmatmul.mubr.f32.gmra.mrb[0].mxu0 %v918
      %v1119 = vpop.f32.mrb[0].mxu0
      %v1120 = vadd.f32 %v991, %v1119
      %v1121 = vpop.f32.mrb[0].mxu0
      %1122 = vmatprep.mubr.f32.mxu0 0.0
      %1123 = vmatmul.mubr.f32.gmra.mrb[0].mxu0 %v919
      %v1124 = vpop.f32.mrb[0].mxu0
      %v1125 = vadd.f32 %v991, %v1124
      %v1126 = vpop.f32.mrb[0].mxu0
      %1127 = vmatprep.mubr.f32.mxu0 0.0
      %1128 = vmatmul.mubr.f32.gmra.mrb[0].mxu0 %v920
      %v1129 = vpop.f32.mrb[0].mxu0
      %v1130 = vadd.f32 %v991, %v1129
      %v1131 = vpop.f32.mrb[0].mxu0
      %1132 = vmatprep.mubr.f32.mxu0 0.0
      %1133 = vmatmul.mubr.f32.gmra.mrb[0].mxu0 %v921
      %v1134 = vpop.f32.mrb[0].mxu0
      %v1135 = vadd.f32 %v991, %v1134
      %v1136 = vpop.f32.mrb[0].mxu0
      %1137 = vmatprep.mubr.f32.mxu0 0.0
      %1138 = vmatmul.mubr.f32.gmra.mrb[0].mxu0 %v922
      %v1139 = vpop.f32.mrb[0].mxu0
      %v1140 = vadd.f32 %v991, %v1139
      %v1141 = vpop.f32.mrb[0].mxu0
      %1142 = vmatprep.mubr.f32.mxu0 0.0
      %1143 = vmatmul.mubr.f32.gmra.mrb[0].mxu0 %v923
      %v1144 = vpop.f32.mrb[0].mxu0
      %v1145 = vadd.f32 %v991, %v1144
      %v1146 = vpop.f32.mrb[0].mxu0
      %1147 = vmatprep.mubr.f32.mxu0 0.0
      %1148 = vmatmul.mubr.f32.gmra.mrb[0].mxu0 %v924
      %v1149 = vpop.f32.mrb[0].mxu0
      %v1150 = vadd.f32 %v991, %v1149
      %v1151 = vpop.f32.mrb[0].mxu0
      %1152 = vmatprep.mubr.f32.mxu0 0.0
      %1153 = vmatmul.mubr.f32.gmra.mrb[0].mxu0 %v925
      %v1154 = vpop.f32.mrb[0].mxu0
      %v1155 = vadd.f32 %v991, %v1154
      %v1156 = vpop.f32.mrb[0].mxu0
      %1157 = vmatprep.mubr.f32.mxu0 0.0
      %1158 = vmatmul.mubr.f32.gmra.mrb[0].mxu0 %v926
      %v1159 = vpop.f32.mrb[0].mxu0
      %v1160 = vadd.f32 %v991, %v1159
      %v1161 = vpop.f32.mrb[0].mxu0
      %1162 = vmatprep.mubr.f32.mxu0 0.0
      %1163 = vmatmul.mubr.f32.gmra.mrb[0].mxu0 %v927
      %v1164 = vpop.f32.mrb[0].mxu0
      %v1165 = vadd.f32 %v991, %v1164
      %v1166 = vpop.f32.mrb[0].mxu0
      %1167 = vmatprep.mubr.f32.mxu0 0.0
      %1168 = vmatmul.mubr.f32.gmra.mrb[0].mxu0 %v928
      %v1169 = vpop.f32.mrb[0].mxu0
      %v1170 = vadd.f32 %v991, %v1169
      %v1171 = vpop.f32.mrb[0].mxu0
      %1172 = vmatprep.mubr.f32.mxu0 0.0
      %1173 = vmatmul.mubr.f32.gmra.mrb[0].mxu0 %v929
      %v1174 = vpop.f32.mrb[0].mxu0
      %v1175 = vadd.f32 %v991, %v1174
      %v1176 = vpop.f32.mrb[0].mxu0
      %1177 = vmatprep.mubr.f32.mxu0 0.0
      %1178 = vmatmul.mubr.f32.gmra.mrb[0].mxu0 %v930
      %v1179 = vpop.f32.mrb[0].mxu0
      %v1180 = vadd.f32 %v991, %v1179
      %v1181 = vpop.f32.mrb[0].mxu0
      %1182 = vmatprep.mubr.f32.mxu0 0.0
      %1183 = vmatmul.mubr.f32.gmra.mrb[0].mxu0 %v931
      %v1184 = vpop.f32.mrb[0].mxu0
      %v1185 = vadd.f32 %v991, %v1184
      %v1186 = vpop.f32.mrb[0].mxu0
      %1187 = vmatprep.mubr.f32.mxu0 0.0
      %1188 = vmatmul.mubr.f32.gmra.mrb[0].mxu0 %v932
      %v1189 = vpop.f32.mrb[0].mxu0
      %v1190 = vadd.f32 %v991, %v1189
      %v1191 = vpop.f32.mrb[0].mxu0
      %1192 = vmatprep.mubr.f32.mxu0 0.0
      %1193 = vmatmul.mubr.f32.gmra.mrb[0].mxu0 %v933
      %v1194 = vpop.f32.mrb[0].mxu0
      %v1195 = vadd.f32 %v991, %v1194
      %v1196 = vpop.f32.mrb[0].mxu0
      %1197 = vmatprep.mubr.f32.mxu0 0.0
      %1198 = vmatmul.mubr.f32.gmra.mrb[0].mxu0 %v934
      %v1199 = vpop.f32.mrb[0].mxu0
      %v1200 = vadd.f32 %v991, %v1199
      %v1201 = vpop.f32.mrb[0].mxu0
      %1202 = vmatprep.mubr.f32.mxu0 0.0
      %1203 = vmatmul.mubr.f32.gmra.mrb[0].mxu0 %v935
      %v1204 = vpop.f32.mrb[0].mxu0
      %v1205 = vadd.f32 %v991, %v1204
      %v1206 = vpop.f32.mrb[0].mxu0
      %1207 = vmatprep.mubr.f32.mxu0 0.0
      %1208 = vmatmul.mubr.f32.gmra.mrb[0].mxu0 %v936
      %v1209 = vpop.f32.mrb[0].mxu0
      %v1210 = vadd.f32 %v991, %v1209
      %v1211 = vpop.f32.mrb[0].mxu0
      %1212 = vmatprep.mubr.f32.mxu0 0.0
      %1213 = vmatmul.mubr.f32.gmra.mrb[0].mxu0 %v937
      %v1214 = vpop.f32.mrb[0].mxu0
      %v1215 = vadd.f32 %v991, %v1214
      %v1216 = vpop.f32.mrb[0].mxu0
      %1217 = vmatprep.mubr.f32.mxu0 0.0
      %1218 = vmatmul.mubr.f32.gmra.mrb[0].mxu0 %v938
      %v1219 = vpop.f32.mrb[0].mxu0
      %v1220 = vadd.f32 %v991, %v1219
      %v1221 = vpop.f32.mrb[0].mxu0
      %1222 = vmatprep.mubr.f32.mxu0 0.0
      %1223 = vmatmul.mubr.f32.gmra.mrb[0].mxu0 %v939
      %v1224 = vpop.f32.mrb[0].mxu0
      %v1225 = vadd.f32 %v991, %v1224
      %v1226 = vpop.f32.mrb[0].mxu0
      %1227 = vmatprep.mubr.f32.mxu0 0.0
      %1228 = vmatmul.mubr.f32.gmra.mrb[0].mxu0 %v940
      %v1229 = vpop.f32.mrb[0].mxu0
      %v1230 = vadd.f32 %v991, %v1229
      %v1231 = vpop.f32.mrb[0].mxu0
      %1232 = vmatprep.mubr.f32.mxu0 0.0
      %1233 = vmatmul.mubr.f32.gmra.mrb[0].mxu0 %v941
      %v1234 = vpop.f32.mrb[0].mxu0
      %v1235 = vadd.f32 %v991, %v1234
      %v1236 = vpop.f32.mrb[0].mxu0
      %1237 = vmatprep.mubr.f32.mxu0 0.0
      %1238 = vmatmul.mubr.f32.gmra.mrb[0].mxu0 %v942
      %v1239 = vpop.f32.mrb[0].mxu0
      %v1240 = vadd.f32 %v991, %v1239
      %v1241 = vpop.f32.mrb[0].mxu0
      %1242 = vmatprep.mubr.f32.mxu0 0.0
      %1243 = vmatmul.mubr.f32.gmra.mrb[0].mxu0 %v943
      %v1244 = vpop.f32.mrb[0].mxu0
      %v1245 = vadd.f32 %v991, %v1244
      %v1246 = vpop.f32.mrb[0].mxu0
      %1247 = vmatprep.mubr.f32.mxu0 0.0
      %1248 = vmatmul.mubr.f32.gmra.mrb[0].mxu0 %v944
      %v1249 = vpop.f32.mrb[0].mxu0
      %v1250 = vadd.f32 %v991, %v1249
      %v1251 = vpop.f32.mrb[0].mxu0
      %1252 = vmatprep.mubr.f32.mxu0 0.0
      %1253 = vmatmul.mubr.f32.gmra.mrb[0].mxu0 %v945
      %v1254 = vpop.f32.mrb[0].mxu0
      %v1255 = vadd.f32 %v991, %v1254
      %v1256 = vpop.f32.mrb[0].mxu0
      %1257 = vmatprep.mubr.f32.mxu0 0.0
      %1258 = vmatmul.mubr.f32.gmra.mrb[0].mxu0 %v946
      %v1259 = vpop.f32.mrb[0].mxu0
      %v1260 = vadd.f32 %v991, %v1259
      %v1261 = vpop.f32.mrb[0].mxu0
      %1262 = vmatprep.mubr.f32.mxu0 0.0
      %1263 = vmatmul.mubr.f32.gmra.mrb[0].mxu0 %v947
      %v1264 = vpop.f32.mrb[0].mxu0
      %v1265 = vadd.f32 %v991, %v1264
      %v1266 = vpop.f32.mrb[0].mxu0
      %1267 = vmatprep.mubr.f32.mxu0 0.0
      %1268 = vmatmul.mubr.f32.gmra.mrb[0].mxu0 %v948
      %v1269 = vpop.f32.mrb[0].mxu0
      %v1270 = vadd.f32 %v991, %v1269
      %v1271 = vpop.f32.mrb[0].mxu0
      %1272 = vmatprep.mubr.f32.mxu0 0.0
      %1273 = vmatmul.mubr.f32.gmra.mrb[0].mxu0 %v949
      %v1274 = vpop.f32.mrb[0].mxu0
      %v1275 = vadd.f32 %v991, %v1274
      %v1276 = vpop.f32.mrb[0].mxu0
      %1277 = vmatprep.mubr.f32.mxu0 0.0
      %1278 = vmatmul.mubr.f32.gmra.mrb[0].mxu0 %v950
      %v1279 = vpop.f32.mrb[0].mxu0
      %v1280 = vadd.f32 %v991, %v1279
      %v1281 = vpop.f32.mrb[0].mxu0
      %1282 = vmatprep.mubr.f32.mxu0 0.0
      %1283 = vmatmul.mubr.f32.gmra.mrb[0].mxu0 %v951
      %v1284 = vpop.f32.mrb[0].mxu0
      %v1285 = vadd.f32 %v991, %v1284
      %v1286 = vpop.f32.mrb[0].mxu0
      %1287 = vmatprep.mubr.f32.mxu0 0.0
      %1288 = vmatmul.mubr.f32.gmra.mrb[0].mxu0 %v952
      %v1289 = vpop.f32.mrb[0].mxu0
      %v1290 = vadd.f32 %v991, %v1289
      %v1291 = vpop.f32.mrb[0].mxu0
      %1292 = vmatprep.mubr.f32.mxu0 0.0
      %1293 = vmatmul.mubr.f32.gmra.mrb[0].mxu0 %v953
      %v1294 = vpop.f32.mrb[0].mxu0
      %v1295 = vadd.f32 %v991, %v1294
      %v1296 = vpop.f32.mrb[0].mxu0
      %1297 = vmatprep.mubr.f32.mxu0 0.0
      %1298 = vmatmul.mubr.f32.gmra.mrb[0].mxu0 %v954
      %v1299 = vpop.f32.mrb[0].mxu0
      %v1300 = vadd.f32 %v991, %v1299
      %v1301 = vpop.f32.mrb[0].mxu0
      %1302 = vmatprep.mubr.f32.mxu0 0.0
      %1303 = vmatmul.mubr.f32.gmra.mrb[0].mxu0 %v955
      %v1304 = vpop.f32.mrb[0].mxu0
      %v1305 = vadd.f32 %v991, %v1304
      %v1306 = vpop.f32.mrb[0].mxu0
      %1307 = vmatprep.mubr.f32.mxu0 0.0
      %1308 = vmatmul.mubr.f32.gmra.mrb[0].mxu0 %v956
      %v1309 = vpop.f32.mrb[0].mxu0
      %v1310 = vadd.f32 %v991, %v1309
      %v1311 = vpop.f32.mrb[0].mxu0
      %1312 = vmatprep.mubr.f32.mxu0 0.0
      %1313 = vmatmul.mubr.f32.gmra.mrb[0].mxu0 %v957
      %v1314 = vpop.f32.mrb[0].mxu0
      %v1315 = vadd.f32 %v991, %v1314
      %v1316 = vpop.f32.mrb[0].mxu0
      %1317 = vmatprep.mubr.f32.mxu0 0.0
      %1318 = vmatmul.mubr.f32.gmra.mrb[0].mxu0 %v958
      %v1319 = vpop.f32.mrb[0].mxu0
      %v1320 = vadd.f32 %v991, %v1319
      %v1321 = vpop.f32.mrb[0].mxu0
      %1322 = vmatprep.mubr.f32.mxu0 0.0
      %1323 = vmatmul.mubr.f32.gmra.mrb[0].mxu0 %v959
      %v1324 = vpop.f32.mrb[0].mxu0
      %v1325 = vadd.f32 %v991, %v1324
      %v1326 = vpop.f32.mrb[0].mxu0
      %1327 = vmatprep.mubr.f32.mxu0 0.0
      %1328 = vmatmul.mubr.f32.gmra.mrb[0].mxu0 %v960
      %v1329 = vpop.f32.mrb[0].mxu0
      %v1330 = vadd.f32 %v991, %v1329
      %v1331 = vpop.f32.mrb[0].mxu0
      %1332 = vmatprep.mubr.f32.mxu0 0.0
      %1333 = vmatmul.mubr.f32.gmra.mrb[0].mxu0 %v961
      %v1334 = vpop.f32.mrb[0].mxu0
      %v1335 = vadd.f32 %v991, %v1334
      %v1336 = vpop.f32.mrb[0].mxu0
      %1337 = vmatprep.mubr.f32.mxu0 0.0
      %1338 = vmatmul.mubr.f32.gmra.mrb[0].mxu0 %v962
      %v1339 = vpop.f32.mrb[0].mxu0
      %v1340 = vadd.f32 %v991, %v1339
      %v1341 = vpop.f32.mrb[0].mxu0
      %1342 = vmatprep.mubr.f32.mxu0 0.0
      %1343 = vmatmul.mubr.f32.gmra.mrb[0].mxu0 %v963
      %v1344 = vpop.f32.mrb[0].mxu0
      %v1345 = vadd.f32 %v991, %v1344
      %v1346 = vpop.f32.mrb[0].mxu0
      %1347 = vmatprep.mubr.f32.mxu0 0.0
      %1348 = vmatmul.mubr.f32.gmra.mrb[0].mxu0 %v964
      %v1349 = vpop.f32.mrb[0].mxu0
      %v1350 = vadd.f32 %v991, %v1349
      %v1351 = vpop.f32.mrb[0].mxu0
      %1352 = vmatprep.mubr.f32.mxu0 0.0
      %1353 = vmatmul.mubr.f32.gmra.mrb[0].mxu0 %v965
      %v1354 = vpop.f32.mrb[0].mxu0
      %v1355 = vadd.f32 %v991, %v1354
      %v1356 = vpop.f32.mrb[0].mxu0
      %1357 = vmatprep.mubr.f32.mxu0 0.0
      %1358 = vmatmul.mubr.f32.gmra.mrb[0].mxu0 %v966
      %v1359 = vpop.f32.mrb[0].mxu0
      %v1360 = vadd.f32 %v991, %v1359
      %v1361 = vpop.f32.mrb[0].mxu0
      %1362 = vmatprep.mubr.f32.mxu0 0.0
      %1363 = vmatmul.mubr.f32.gmra.mrb[0].mxu0 %v967
      %v1364 = vpop.f32.mrb[0].mxu0
      %v1365 = vadd.f32 %v991, %v1364
      %v1366 = vpop.f32.mrb[0].mxu0
      %1367 = vmatprep.mubr.f32.mxu0 0.0
      %1368 = vmatmul.mubr.f32.gmra.mrb[0].mxu0 %v968
      %v1369 = vpop.f32.mrb[0].mxu0
      %v1370 = vadd.f32 %v991, %v1369
      %v1371 = vpop.f32.mrb[0].mxu0
      %1372 = vmatprep.mubr.f32.mxu0 0.0
      %1373 = vmatmul.mubr.f32.gmra.mrb[0].mxu0 %v969
      %v1374 = vpop.f32.mrb[0].mxu0
      %v1375 = vadd.f32 %v991, %v1374
      %v1376 = vpop.f32.mrb[0].mxu0
      %1377 = vdwg.mxu0
      %v1378 = vmax.f32 %v1060, 0.0
      %v1379 = vmax.f32 %v1065, 0.0
      %v1380 = vmax.f32 %v1070, 0.0
      %v1381 = vmax.f32 %v1075, 0.0
      %v1382 = vmax.f32 %v1080, 0.0
      %v1383 = vmax.f32 %v1085, 0.0
      %v1384 = vmax.f32 %v1090, 0.0
      %v1385 = vmax.f32 %v1095, 0.0
      %v1386 = vmax.f32 %v1100, 0.0
      %v1387 = vmax.f32 %v1105, 0.0
      %v1388 = vmax.f32 %v1110, 0.0
      %v1389 = vmax.f32 %v1115, 0.0
      %v1390 = vmax.f32 %v1120, 0.0
      %v1391 = vmax.f32 %v1125, 0.0
      %v1392 = vmax.f32 %v1130, 0.0
      %v1393 = vmax.f32 %v1135, 0.0
      %v1394 = vmax.f32 %v1140, 0.0
      %v1395 = vmax.f32 %v1145, 0.0
      %v1396 = vmax.f32 %v1150, 0.0
      %v1397 = vmax.f32 %v1155, 0.0
      %v1398 = vmax.f32 %v1160, 0.0
      %v1399 = vmax.f32 %v1165, 0.0
      %v1400 = vmax.f32 %v1170, 0.0
      %v1401 = vmax.f32 %v1175, 0.0
      %v1402 = vmax.f32 %v1180, 0.0
      %v1403 = vmax.f32 %v1185, 0.0
      %v1404 = vmax.f32 %v1190, 0.0
      %v1405 = vmax.f32 %v1195, 0.0
      %v1406 = vmax.f32 %v1200, 0.0
      %v1407 = vmax.f32 %v1205, 0.0
      %v1408 = vmax.f32 %v1210, 0.0
      %v1409 = vmax.f32 %v1215, 0.0
      %v1410 = vmax.f32 %v1220, 0.0
      %v1411 = vmax.f32 %v1225, 0.0
      %v1412 = vmax.f32 %v1230, 0.0
      %v1413 = vmax.f32 %v1235, 0.0
      %v1414 = vmax.f32 %v1240, 0.0
      %v1415 = vmax.f32 %v1245, 0.0
      %v1416 = vmax.f32 %v1250, 0.0
      %v1417 = vmax.f32 %v1255, 0.0
      %v1418 = vmax.f32 %v1260, 0.0
      %v1419 = vmax.f32 %v1265, 0.0
      %v1420 = vmax.f32 %v1270, 0.0
      %v1421 = vmax.f32 %v1275, 0.0
      %v1422 = vmax.f32 %v1280, 0.0
      %v1423 = vmax.f32 %v1285, 0.0
      %v1424 = vmax.f32 %v1290, 0.0
      %v1425 = vmax.f32 %v1295, 0.0
      %v1426 = vmax.f32 %v1300, 0.0
      %v1427 = vmax.f32 %v1305, 0.0
      %v1428 = vmax.f32 %v1310, 0.0
      %v1429 = vmax.f32 %v1315, 0.0
      %v1430 = vmax.f32 %v1320, 0.0
      %v1431 = vmax.f32 %v1325, 0.0
      %v1432 = vmax.f32 %v1330, 0.0
      %v1433 = vmax.f32 %v1335, 0.0
      %v1434 = vmax.f32 %v1340, 0.0
      %v1435 = vmax.f32 %v1345, 0.0
      %v1436 = vmax.f32 %v1350, 0.0
      %v1437 = vmax.f32 %v1355, 0.0
      %v1438 = vmax.f32 %v1360, 0.0
      %v1439 = vmax.f32 %v1365, 0.0
      %v1440 = vmax.f32 %v1370, 0.0
      %v1441 = vmax.f32 %v1375, 0.0
      %v1442 = vld [vmem:[%s5] sm:$0xff]
      %v1443 = vld [vmem:[%s5 + $0x8] sm:$0xff]
      %v1444 = vld [vmem:[%s5 + $0x10] sm:$0xff]
      %v1445 = vld [vmem:[%s5 + $0x18] sm:$0xff]
      %v1446 = vld [vmem:[%s5 + $0x20] sm:$0xff]
      %v1447 = vld [vmem:[%s5 + $0x28] sm:$0xff]
      %v1448 = vld [vmem:[%s5 + $0x30] sm:$0xff]
      %v1449 = vld [vmem:[%s5 + $0x38] sm:$0xff]
      %vm1450 = vcmask 523264
      %v1452 = vsel %vm1450, %v1378, 0
      %v1455 = vsel %vm1450, %v1379, 0
      %v1458 = vsel %vm1450, %v1380, 0
      %v1461 = vsel %vm1450, %v1381, 0
      %v1464 = vsel %vm1450, %v1382, 0
      %v1467 = vsel %vm1450, %v1383, 0
      %v1470 = vsel %vm1450, %v1384, 0
      %v1473 = vsel %vm1450, %v1385, 0
      %v1476 = vsel %vm1450, %v1386, 0
      %v1479 = vsel %vm1450, %v1387, 0
      %v1482 = vsel %vm1450, %v1388, 0
      %v1485 = vsel %vm1450, %v1389, 0
      %v1488 = vsel %vm1450, %v1390, 0
      %v1491 = vsel %vm1450, %v1391, 0
      %v1494 = vsel %vm1450, %v1392, 0
      %v1497 = vsel %vm1450, %v1393, 0
      %v1500 = vsel %vm1450, %v1394, 0
      %v1503 = vsel %vm1450, %v1395, 0
      %v1506 = vsel %vm1450, %v1396, 0
      %v1509 = vsel %vm1450, %v1397, 0
      %v1512 = vsel %vm1450, %v1398, 0
      %v1515 = vsel %vm1450, %v1399, 0
      %v1518 = vsel %vm1450, %v1400, 0
      %v1521 = vsel %vm1450, %v1401, 0
      %v1524 = vsel %vm1450, %v1402, 0
      %v1527 = vsel %vm1450, %v1403, 0
      %v1530 = vsel %vm1450, %v1404, 0
      %v1533 = vsel %vm1450, %v1405, 0
      %v1536 = vsel %vm1450, %v1406, 0
      %v1539 = vsel %vm1450, %v1407, 0
      %v1542 = vsel %vm1450, %v1408, 0
      %v1545 = vsel %vm1450, %v1409, 0
      %v1548 = vsel %vm1450, %v1410, 0
      %v1551 = vsel %vm1450, %v1411, 0
      %v1554 = vsel %vm1450, %v1412, 0
      %v1557 = vsel %vm1450, %v1413, 0
      %v1560 = vsel %vm1450, %v1414, 0
      %v1563 = vsel %vm1450, %v1415, 0
      %v1566 = vsel %vm1450, %v1416, 0
      %v1569 = vsel %vm1450, %v1417, 0
      %v1572 = vsel %vm1450, %v1418, 0
      %v1575 = vsel %vm1450, %v1419, 0
      %v1578 = vsel %vm1450, %v1420, 0
      %v1581 = vsel %vm1450, %v1421, 0
      %v1584 = vsel %vm1450, %v1422, 0
      %v1587 = vsel %vm1450, %v1423, 0
      %v1590 = vsel %vm1450, %v1424, 0
      %v1593 = vsel %vm1450, %v1425, 0
      %v1596 = vsel %vm1450, %v1426, 0
      %v1599 = vsel %vm1450, %v1427, 0
      %v1602 = vsel %vm1450, %v1428, 0
      %v1605 = vsel %vm1450, %v1429, 0
      %v1608 = vsel %vm1450, %v1430, 0
      %v1611 = vsel %vm1450, %v1431, 0
      %v1614 = vsel %vm1450, %v1432, 0
      %v1617 = vsel %vm1450, %v1433, 0
      %v1620 = vsel %vm1450, %v1434, 0
      %v1623 = vsel %vm1450, %v1435, 0
      %v1626 = vsel %vm1450, %v1436, 0
      %v1629 = vsel %vm1450, %v1437, 0
      %v1632 = vsel %vm1450, %v1438, 0
      %v1635 = vsel %vm1450, %v1439, 0
      %v1638 = vsel %vm1450, %v1440, 0
      %v1641 = vsel %vm1450, %v1441, 0
      %1643 = vmatprep.subr.mxu0 0.0
      %1644 = vmatpush1.msra.mxu0 %v1442
      %1645 = vmatprep.subr.mxu0 0.0
      %1646 = vmatpush1.msra.mxu0 %v1443
      %1647 = vmatprep.subr.mxu0 0.0
      %1648 = vmatpush1.msra.mxu0 %v1444
      %1649 = vmatprep.subr.mxu0 0.0
      %1650 = vmatpush1.msra.mxu0 %v1445
      %1651 = vmatprep.subr.mxu0 0.0
      %1652 = vmatpush1.msra.mxu0 %v1446
      %1653 = vmatprep.subr.mxu0 0.0
      %1654 = vmatpush1.msra.mxu0 %v1447
      %1655 = vmatprep.subr.mxu0 0.0
      %1656 = vmatpush1.msra.mxu0 %v1448
      %1657 = vmatprep.subr.mxu0 0.0
      %1658 = vmatpush1.msra.mxu0 %v1449
      %1659 = vmatprep.subr.mxu0 0.0
      %1660 = vmatpush1.msra.mxu0 0.0
      %1661 = vmatprep.subr.mxu0 0.0
      %1662 = vmatpush1.msra.mxu0 0.0
      %1663 = vmatprep.subr.mxu0 0.0
      %1664 = vmatpush1.msra.mxu0 0.0
      %1665 = vmatprep.subr.mxu0 0.0
      %1666 = vmatpush1.msra.mxu0 0.0
      %1667 = vmatprep.subr.mxu0 0.0
      %1668 = vmatpush1.msra.mxu0 0.0
      %1669 = vmatprep.subr.mxu0 0.0
      %1670 = vmatpush1.msra.mxu0 0.0
      %1671 = vmatprep.subr.mxu0 0.0
      %1672 = vmatpush1.msra.mxu0 0.0
      %1673 = vmatprep.subr.mxu0 0.0
      %1674 = vmatpush1.msra.mxu0 0.0
      %1675 = vmatprep.subr.mxu0 0.0
      %1676 = vmatpush1.msra.mxu0 0.0
      %1677 = vmatprep.subr.mxu0 0.0
      %1678 = vmatpush1.msra.mxu0 0.0
      %1679 = vmatprep.subr.mxu0 0.0
      %1680 = vmatpush1.msra.mxu0 0.0
      %1681 = vmatprep.subr.mxu0 0.0
      %1682 = vmatpush1.msra.mxu0 0.0
      %1683 = vmatprep.subr.mxu0 0.0
      %1684 = vmatpush1.msra.mxu0 0.0
      %1685 = vmatprep.subr.mxu0 0.0
      %1686 = vmatpush1.msra.mxu0 0.0
      %1687 = vmatprep.subr.mxu0 0.0
      %1688 = vmatpush1.msra.mxu0 0.0
      %1689 = vmatprep.subr.mxu0 0.0
      %1690 = vmatpush1.msra.mxu0 0.0
      %1691 = vmatprep.subr.mxu0 0.0
      %1692 = vmatpush1.msra.mxu0 0.0
      %1693 = vmatprep.subr.mxu0 0.0
      %1694 = vmatpush1.msra.mxu0 0.0
      %1695 = vmatprep.subr.mxu0 0.0
      %1696 = vmatpush1.msra.mxu0 0.0
      %1697 = vmatprep.subr.mxu0 0.0
      %1698 = vmatpush1.msra.mxu0 0.0
      %1699 = vmatprep.subr.mxu0 0.0
      %1700 = vmatpush1.msra.mxu0 0.0
      %1701 = vmatprep.subr.mxu0 0.0
      %1702 = vmatpush1.msra.mxu0 0.0
      %1703 = vmatprep.subr.mxu0 0.0
      %1704 = vmatpush1.msra.mxu0 0.0
      %1705 = vmatprep.subr.mxu0 0.0
      %1706 = vmatpush1.msra.mxu0 0.0
      %1707 = vmatprep.mubr.f32.mxu0 0.0
      %1708 = vmatmul.mubr.f32.gmra.mrb[0].mxu0 %v1452
      %v1709 = vpop.f32.mrb[0].mxu0
      %v1710 = vadd.f32 0.0, %v1709
      %v1711 = vpop.f32.mrb[0].mxu0
      %1712 = vmatprep.mubr.f32.mxu0 0.0
      %1713 = vmatmul.mubr.f32.gmra.mrb[0].mxu0 %v1455
      %v1714 = vpop.f32.mrb[0].mxu0
      %v1715 = vadd.f32 0.0, %v1714
      %v1716 = vpop.f32.mrb[0].mxu0
      %1717 = vmatprep.mubr.f32.mxu0 0.0
      %1718 = vmatmul.mubr.f32.gmra.mrb[0].mxu0 %v1458
      %v1719 = vpop.f32.mrb[0].mxu0
      %v1720 = vadd.f32 0.0, %v1719
      %v1721 = vpop.f32.mrb[0].mxu0
      %1722 = vmatprep.mubr.f32.mxu0 0.0
      %1723 = vmatmul.mubr.f32.gmra.mrb[0].mxu0 %v1461
      %v1724 = vpop.f32.mrb[0].mxu0
      %v1725 = vadd.f32 0.0, %v1724
      %v1726 = vpop.f32.mrb[0].mxu0
      %1727 = vmatprep.mubr.f32.mxu0 0.0
      %1728 = vmatmul.mubr.f32.gmra.mrb[0].mxu0 %v1464
      %v1729 = vpop.f32.mrb[0].mxu0
      %v1730 = vadd.f32 0.0, %v1729
      %v1731 = vpop.f32.mrb[0].mxu0
      %1732 = vmatprep.mubr.f32.mxu0 0.0
      %1733 = vmatmul.mubr.f32.gmra.mrb[0].mxu0 %v1467
      %v1734 = vpop.f32.mrb[0].mxu0
      %v1735 = vadd.f32 0.0, %v1734
      %v1736 = vpop.f32.mrb[0].mxu0
      %1737 = vmatprep.mubr.f32.mxu0 0.0
      %1738 = vmatmul.mubr.f32.gmra.mrb[0].mxu0 %v1470
      %v1739 = vpop.f32.mrb[0].mxu0
      %v1740 = vadd.f32 0.0, %v1739
      %v1741 = vpop.f32.mrb[0].mxu0
      %1742 = vmatprep.mubr.f32.mxu0 0.0
      %1743 = vmatmul.mubr.f32.gmra.mrb[0].mxu0 %v1473
      %v1744 = vpop.f32.mrb[0].mxu0
      %v1745 = vadd.f32 0.0, %v1744
      %v1746 = vpop.f32.mrb[0].mxu0
      %1747 = vmatprep.mubr.f32.mxu0 0.0
      %1748 = vmatmul.mubr.f32.gmra.mrb[0].mxu0 %v1476
      %v1749 = vpop.f32.mrb[0].mxu0
      %v1750 = vadd.f32 0.0, %v1749
      %v1751 = vpop.f32.mrb[0].mxu0
      %1752 = vmatprep.mubr.f32.mxu0 0.0
      %1753 = vmatmul.mubr.f32.gmra.mrb[0].mxu0 %v1479
      %v1754 = vpop.f32.mrb[0].mxu0
      %v1755 = vadd.f32 0.0, %v1754
      %v1756 = vpop.f32.mrb[0].mxu0
      %1757 = vmatprep.mubr.f32.mxu0 0.0
      %1758 = vmatmul.mubr.f32.gmra.mrb[0].mxu0 %v1482
      %v1759 = vpop.f32.mrb[0].mxu0
      %v1760 = vadd.f32 0.0, %v1759
      %v1761 = vpop.f32.mrb[0].mxu0
      %1762 = vmatprep.mubr.f32.mxu0 0.0
      %1763 = vmatmul.mubr.f32.gmra.mrb[0].mxu0 %v1485
      %v1764 = vpop.f32.mrb[0].mxu0
      %v1765 = vadd.f32 0.0, %v1764
      %v1766 = vpop.f32.mrb[0].mxu0
      %1767 = vmatprep.mubr.f32.mxu0 0.0
      %1768 = vmatmul.mubr.f32.gmra.mrb[0].mxu0 %v1488
      %v1769 = vpop.f32.mrb[0].mxu0
      %v1770 = vadd.f32 0.0, %v1769
      %v1771 = vpop.f32.mrb[0].mxu0
      %1772 = vmatprep.mubr.f32.mxu0 0.0
      %1773 = vmatmul.mubr.f32.gmra.mrb[0].mxu0 %v1491
      %v1774 = vpop.f32.mrb[0].mxu0
      %v1775 = vadd.f32 0.0, %v1774
      %v1776 = vpop.f32.mrb[0].mxu0
      %1777 = vmatprep.mubr.f32.mxu0 0.0
      %1778 = vmatmul.mubr.f32.gmra.mrb[0].mxu0 %v1494
      %v1779 = vpop.f32.mrb[0].mxu0
      %v1780 = vadd.f32 0.0, %v1779
      %v1781 = vpop.f32.mrb[0].mxu0
      %1782 = vmatprep.mubr.f32.mxu0 0.0
      %1783 = vmatmul.mubr.f32.gmra.mrb[0].mxu0 %v1497
      %v1784 = vpop.f32.mrb[0].mxu0
      %v1785 = vadd.f32 0.0, %v1784
      %v1786 = vpop.f32.mrb[0].mxu0
      %1787 = vmatprep.mubr.f32.mxu0 0.0
      %1788 = vmatmul.mubr.f32.gmra.mrb[0].mxu0 %v1500
      %v1789 = vpop.f32.mrb[0].mxu0
      %v1790 = vadd.f32 0.0, %v1789
      %v1791 = vpop.f32.mrb[0].mxu0
      %1792 = vmatprep.mubr.f32.mxu0 0.0
      %1793 = vmatmul.mubr.f32.gmra.mrb[0].mxu0 %v1503
      %v1794 = vpop.f32.mrb[0].mxu0
      %v1795 = vadd.f32 0.0, %v1794
      %v1796 = vpop.f32.mrb[0].mxu0
      %1797 = vmatprep.mubr.f32.mxu0 0.0
      %1798 = vmatmul.mubr.f32.gmra.mrb[0].mxu0 %v1506
      %v1799 = vpop.f32.mrb[0].mxu0
      %v1800 = vadd.f32 0.0, %v1799
      %v1801 = vpop.f32.mrb[0].mxu0
      %1802 = vmatprep.mubr.f32.mxu0 0.0
      %1803 = vmatmul.mubr.f32.gmra.mrb[0].mxu0 %v1509
      %v1804 = vpop.f32.mrb[0].mxu0
      %v1805 = vadd.f32 0.0, %v1804
      %v1806 = vpop.f32.mrb[0].mxu0
      %1807 = vmatprep.mubr.f32.mxu0 0.0
      %1808 = vmatmul.mubr.f32.gmra.mrb[0].mxu0 %v1512
      %v1809 = vpop.f32.mrb[0].mxu0
      %v1810 = vadd.f32 0.0, %v1809
      %v1811 = vpop.f32.mrb[0].mxu0
      %1812 = vmatprep.mubr.f32.mxu0 0.0
      %1813 = vmatmul.mubr.f32.gmra.mrb[0].mxu0 %v1515
      %v1814 = vpop.f32.mrb[0].mxu0
      %v1815 = vadd.f32 0.0, %v1814
      %v1816 = vpop.f32.mrb[0].mxu0
      %1817 = vmatprep.mubr.f32.mxu0 0.0
      %1818 = vmatmul.mubr.f32.gmra.mrb[0].mxu0 %v1518
      %v1819 = vpop.f32.mrb[0].mxu0
      %v1820 = vadd.f32 0.0, %v1819
      %v1821 = vpop.f32.mrb[0].mxu0
      %1822 = vmatprep.mubr.f32.mxu0 0.0
      %1823 = vmatmul.mubr.f32.gmra.mrb[0].mxu0 %v1521
      %v1824 = vpop.f32.mrb[0].mxu0
      %v1825 = vadd.f32 0.0, %v1824
      %v1826 = vpop.f32.mrb[0].mxu0
      %1827 = vmatprep.mubr.f32.mxu0 0.0
      %1828 = vmatmul.mubr.f32.gmra.mrb[0].mxu0 %v1524
      %v1829 = vpop.f32.mrb[0].mxu0
      %v1830 = vadd.f32 0.0, %v1829
      %v1831 = vpop.f32.mrb[0].mxu0
      %1832 = vmatprep.mubr.f32.mxu0 0.0
      %1833 = vmatmul.mubr.f32.gmra.mrb[0].mxu0 %v1527
      %v1834 = vpop.f32.mrb[0].mxu0
      %v1835 = vadd.f32 0.0, %v1834
      %v1836 = vpop.f32.mrb[0].mxu0
      %1837 = vmatprep.mubr.f32.mxu0 0.0
      %1838 = vmatmul.mubr.f32.gmra.mrb[0].mxu0 %v1530
      %v1839 = vpop.f32.mrb[0].mxu0
      %v1840 = vadd.f32 0.0, %v1839
      %v1841 = vpop.f32.mrb[0].mxu0
      %1842 = vmatprep.mubr.f32.mxu0 0.0
      %1843 = vmatmul.mubr.f32.gmra.mrb[0].mxu0 %v1533
      %v1844 = vpop.f32.mrb[0].mxu0
      %v1845 = vadd.f32 0.0, %v1844
      %v1846 = vpop.f32.mrb[0].mxu0
      %1847 = vmatprep.mubr.f32.mxu0 0.0
      %1848 = vmatmul.mubr.f32.gmra.mrb[0].mxu0 %v1536
      %v1849 = vpop.f32.mrb[0].mxu0
      %v1850 = vadd.f32 0.0, %v1849
      %v1851 = vpop.f32.mrb[0].mxu0
      %1852 = vmatprep.mubr.f32.mxu0 0.0
      %1853 = vmatmul.mubr.f32.gmra.mrb[0].mxu0 %v1539
      %v1854 = vpop.f32.mrb[0].mxu0
      %v1855 = vadd.f32 0.0, %v1854
      %v1856 = vpop.f32.mrb[0].mxu0
      %1857 = vmatprep.mubr.f32.mxu0 0.0
      %1858 = vmatmul.mubr.f32.gmra.mrb[0].mxu0 %v1542
      %v1859 = vpop.f32.mrb[0].mxu0
      %v1860 = vadd.f32 0.0, %v1859
      %v1861 = vpop.f32.mrb[0].mxu0
      %1862 = vmatprep.mubr.f32.mxu0 0.0
      %1863 = vmatmul.mubr.f32.gmra.mrb[0].mxu0 %v1545
      %v1864 = vpop.f32.mrb[0].mxu0
      %v1865 = vadd.f32 0.0, %v1864
      %v1866 = vpop.f32.mrb[0].mxu0
      %1867 = vmatprep.mubr.f32.mxu0 0.0
      %1868 = vmatmul.mubr.f32.gmra.mrb[0].mxu0 %v1548
      %v1869 = vpop.f32.mrb[0].mxu0
      %v1870 = vadd.f32 0.0, %v1869
      %v1871 = vpop.f32.mrb[0].mxu0
      %1872 = vmatprep.mubr.f32.mxu0 0.0
      %1873 = vmatmul.mubr.f32.gmra.mrb[0].mxu0 %v1551
      %v1874 = vpop.f32.mrb[0].mxu0
      %v1875 = vadd.f32 0.0, %v1874
      %v1876 = vpop.f32.mrb[0].mxu0
      %1877 = vmatprep.mubr.f32.mxu0 0.0
      %1878 = vmatmul.mubr.f32.gmra.mrb[0].mxu0 %v1554
      %v1879 = vpop.f32.mrb[0].mxu0
      %v1880 = vadd.f32 0.0, %v1879
      %v1881 = vpop.f32.mrb[0].mxu0
      %1882 = vmatprep.mubr.f32.mxu0 0.0
      %1883 = vmatmul.mubr.f32.gmra.mrb[0].mxu0 %v1557
      %v1884 = vpop.f32.mrb[0].mxu0
      %v1885 = vadd.f32 0.0, %v1884
      %v1886 = vpop.f32.mrb[0].mxu0
      %1887 = vmatprep.mubr.f32.mxu0 0.0
      %1888 = vmatmul.mubr.f32.gmra.mrb[0].mxu0 %v1560
      %v1889 = vpop.f32.mrb[0].mxu0
      %v1890 = vadd.f32 0.0, %v1889
      %v1891 = vpop.f32.mrb[0].mxu0
      %1892 = vmatprep.mubr.f32.mxu0 0.0
      %1893 = vmatmul.mubr.f32.gmra.mrb[0].mxu0 %v1563
      %v1894 = vpop.f32.mrb[0].mxu0
      %v1895 = vadd.f32 0.0, %v1894
      %v1896 = vpop.f32.mrb[0].mxu0
      %1897 = vmatprep.mubr.f32.mxu0 0.0
      %1898 = vmatmul.mubr.f32.gmra.mrb[0].mxu0 %v1566
      %v1899 = vpop.f32.mrb[0].mxu0
      %v1900 = vadd.f32 0.0, %v1899
      %v1901 = vpop.f32.mrb[0].mxu0
      %1902 = vmatprep.mubr.f32.mxu0 0.0
      %1903 = vmatmul.mubr.f32.gmra.mrb[0].mxu0 %v1569
      %v1904 = vpop.f32.mrb[0].mxu0
      %v1905 = vadd.f32 0.0, %v1904
      %v1906 = vpop.f32.mrb[0].mxu0
      %1907 = vmatprep.mubr.f32.mxu0 0.0
      %1908 = vmatmul.mubr.f32.gmra.mrb[0].mxu0 %v1572
      %v1909 = vpop.f32.mrb[0].mxu0
      %v1910 = vadd.f32 0.0, %v1909
      %v1911 = vpop.f32.mrb[0].mxu0
      %1912 = vmatprep.mubr.f32.mxu0 0.0
      %1913 = vmatmul.mubr.f32.gmra.mrb[0].mxu0 %v1575
      %v1914 = vpop.f32.mrb[0].mxu0
      %v1915 = vadd.f32 0.0, %v1914
      %v1916 = vpop.f32.mrb[0].mxu0
      %1917 = vmatprep.mubr.f32.mxu0 0.0
      %1918 = vmatmul.mubr.f32.gmra.mrb[0].mxu0 %v1578
      %v1919 = vpop.f32.mrb[0].mxu0
      %v1920 = vadd.f32 0.0, %v1919
      %v1921 = vpop.f32.mrb[0].mxu0
      %1922 = vmatprep.mubr.f32.mxu0 0.0
      %1923 = vmatmul.mubr.f32.gmra.mrb[0].mxu0 %v1581
      %v1924 = vpop.f32.mrb[0].mxu0
      %v1925 = vadd.f32 0.0, %v1924
      %v1926 = vpop.f32.mrb[0].mxu0
      %1927 = vmatprep.mubr.f32.mxu0 0.0
      %1928 = vmatmul.mubr.f32.gmra.mrb[0].mxu0 %v1584
      %v1929 = vpop.f32.mrb[0].mxu0
      %v1930 = vadd.f32 0.0, %v1929
      %v1931 = vpop.f32.mrb[0].mxu0
      %1932 = vmatprep.mubr.f32.mxu0 0.0
      %1933 = vmatmul.mubr.f32.gmra.mrb[0].mxu0 %v1587
      %v1934 = vpop.f32.mrb[0].mxu0
      %v1935 = vadd.f32 0.0, %v1934
      %v1936 = vpop.f32.mrb[0].mxu0
      %1937 = vmatprep.mubr.f32.mxu0 0.0
      %1938 = vmatmul.mubr.f32.gmra.mrb[0].mxu0 %v1590
      %v1939 = vpop.f32.mrb[0].mxu0
      %v1940 = vadd.f32 0.0, %v1939
      %v1941 = vpop.f32.mrb[0].mxu0
      %1942 = vmatprep.mubr.f32.mxu0 0.0
      %1943 = vmatmul.mubr.f32.gmra.mrb[0].mxu0 %v1593
      %v1944 = vpop.f32.mrb[0].mxu0
      %v1945 = vadd.f32 0.0, %v1944
      %v1946 = vpop.f32.mrb[0].mxu0
      %1947 = vmatprep.mubr.f32.mxu0 0.0
      %1948 = vmatmul.mubr.f32.gmra.mrb[0].mxu0 %v1596
      %v1949 = vpop.f32.mrb[0].mxu0
      %v1950 = vadd.f32 0.0, %v1949
      %v1951 = vpop.f32.mrb[0].mxu0
      %1952 = vmatprep.mubr.f32.mxu0 0.0
      %1953 = vmatmul.mubr.f32.gmra.mrb[0].mxu0 %v1599
      %v1954 = vpop.f32.mrb[0].mxu0
      %v1955 = vadd.f32 0.0, %v1954
      %v1956 = vpop.f32.mrb[0].mxu0
      %1957 = vmatprep.mubr.f32.mxu0 0.0
      %1958 = vmatmul.mubr.f32.gmra.mrb[0].mxu0 %v1602
      %v1959 = vpop.f32.mrb[0].mxu0
      %v1960 = vadd.f32 0.0, %v1959
      %v1961 = vpop.f32.mrb[0].mxu0
      %1962 = vmatprep.mubr.f32.mxu0 0.0
      %1963 = vmatmul.mubr.f32.gmra.mrb[0].mxu0 %v1605
      %v1964 = vpop.f32.mrb[0].mxu0
      %v1965 = vadd.f32 0.0, %v1964
      %v1966 = vpop.f32.mrb[0].mxu0
      %1967 = vmatprep.mubr.f32.mxu0 0.0
      %1968 = vmatmul.mubr.f32.gmra.mrb[0].mxu0 %v1608
      %v1969 = vpop.f32.mrb[0].mxu0
      %v1970 = vadd.f32 0.0, %v1969
      %v1971 = vpop.f32.mrb[0].mxu0
      %1972 = vmatprep.mubr.f32.mxu0 0.0
      %1973 = vmatmul.mubr.f32.gmra.mrb[0].mxu0 %v1611
      %v1974 = vpop.f32.mrb[0].mxu0
      %v1975 = vadd.f32 0.0, %v1974
      %v1976 = vpop.f32.mrb[0].mxu0
      %1977 = vmatprep.mubr.f32.mxu0 0.0
      %1978 = vmatmul.mubr.f32.gmra.mrb[0].mxu0 %v1614
      %v1979 = vpop.f32.mrb[0].mxu0
      %v1980 = vadd.f32 0.0, %v1979
      %v1981 = vpop.f32.mrb[0].mxu0
      %1982 = vmatprep.mubr.f32.mxu0 0.0
      %1983 = vmatmul.mubr.f32.gmra.mrb[0].mxu0 %v1617
      %v1984 = vpop.f32.mrb[0].mxu0
      %v1985 = vadd.f32 0.0, %v1984
      %v1986 = vpop.f32.mrb[0].mxu0
      %1987 = vmatprep.mubr.f32.mxu0 0.0
      %1988 = vmatmul.mubr.f32.gmra.mrb[0].mxu0 %v1620
      %v1989 = vpop.f32.mrb[0].mxu0
      %v1990 = vadd.f32 0.0, %v1989
      %v1991 = vpop.f32.mrb[0].mxu0
      %1992 = vmatprep.mubr.f32.mxu0 0.0
      %1993 = vmatmul.mubr.f32.gmra.mrb[0].mxu0 %v1623
      %v1994 = vpop.f32.mrb[0].mxu0
      %v1995 = vadd.f32 0.0, %v1994
      %v1996 = vpop.f32.mrb[0].mxu0
      %1997 = vmatprep.mubr.f32.mxu0 0.0
      %1998 = vmatmul.mubr.f32.gmra.mrb[0].mxu0 %v1626
      %v1999 = vpop.f32.mrb[0].mxu0
      %v2000 = vadd.f32 0.0, %v1999
      %v2001 = vpop.f32.mrb[0].mxu0
      %2002 = vmatprep.mubr.f32.mxu0 0.0
      %2003 = vmatmul.mubr.f32.gmra.mrb[0].mxu0 %v1629
      %v2004 = vpop.f32.mrb[0].mxu0
      %v2005 = vadd.f32 0.0, %v2004
      %v2006 = vpop.f32.mrb[0].mxu0
      %2007 = vmatprep.mubr.f32.mxu0 0.0
      %2008 = vmatmul.mubr.f32.gmra.mrb[0].mxu0 %v1632
      %v2009 = vpop.f32.mrb[0].mxu0
      %v2010 = vadd.f32 0.0, %v2009
      %v2011 = vpop.f32.mrb[0].mxu0
      %2012 = vmatprep.mubr.f32.mxu0 0.0
      %2013 = vmatmul.mubr.f32.gmra.mrb[0].mxu0 %v1635
      %v2014 = vpop.f32.mrb[0].mxu0
      %v2015 = vadd.f32 0.0, %v2014
      %v2016 = vpop.f32.mrb[0].mxu0
      %2017 = vmatprep.mubr.f32.mxu0 0.0
      %2018 = vmatmul.mubr.f32.gmra.mrb[0].mxu0 %v1638
      %v2019 = vpop.f32.mrb[0].mxu0
      %v2020 = vadd.f32 0.0, %v2019
      %v2021 = vpop.f32.mrb[0].mxu0
      %2022 = vmatprep.mubr.f32.mxu0 0.0
      %2023 = vmatmul.mubr.f32.gmra.mrb[0].mxu0 %v1641
      %v2024 = vpop.f32.mrb[0].mxu0
      %v2025 = vadd.f32 0.0, %v2024
      %v2026 = vpop.f32.mrb[0].mxu0
      %2027 = vdwg.mxu0
      %2028 = vxpose.xlu0.b32.start [1/16] %v1710, 128
      %2029 = vxpose.xlu0.b32.cont [2/16] %v1715, 128
      %2030 = vxpose.xlu0.b32.cont [3/16] %v1720, 128
      %2031 = vxpose.xlu0.b32.cont [4/16] %v1725, 128
      %2032 = vxpose.xlu0.b32.cont [5/16] %v1730, 128
      %2033 = vxpose.xlu0.b32.cont [6/16] %v1735, 128
      %2034 = vxpose.xlu0.b32.cont [7/16] %v1740, 128
      %2035 = vxpose.xlu0.b32.cont [8/16] %v1745, 128
      %2036 = vxpose.xlu0.b32.cont [9/16] %v1750, 128
      %2037 = vxpose.xlu0.b32.cont [10/16] %v1755, 128
      %2038 = vxpose.xlu0.b32.cont [11/16] %v1760, 128
      %2039 = vxpose.xlu0.b32.cont [12/16] %v1765, 128
      %2040 = vxpose.xlu0.b32.cont [13/16] %v1770, 128
      %2041 = vxpose.xlu0.b32.cont [14/16] %v1775, 128
      %2042 = vxpose.xlu0.b32.cont [15/16] %v1780, 128
      %2043 = vxpose.xlu0.b32.end [16/16] %v1785, 128
      %v2044 = vpop.trf.xlu0
      %v2045 = vpop.trf.xlu0
      %v2046 = vpop.trf.xlu0
      %v2047 = vpop.trf.xlu0
      %v2048 = vpop.trf.xlu0
      %v2049 = vpop.trf.xlu0
      %v2050 = vpop.trf.xlu0
      %v2051 = vpop.trf.xlu0
      %v2052 = vpop.trf.xlu0
      %v2053 = vpop.trf.xlu0
      %v2054 = vpop.trf.xlu0
      %v2055 = vpop.trf.xlu0
      %v2056 = vpop.trf.xlu0
      %v2057 = vpop.trf.xlu0
      %v2058 = vpop.trf.xlu0
      %v2059 = vpop.trf.xlu0
      %2060 = vxpose.xlu0.b32.start [1/16] %v1790, 128
      %2061 = vxpose.xlu0.b32.cont [2/16] %v1795, 128
      %2062 = vxpose.xlu0.b32.cont [3/16] %v1800, 128
      %2063 = vxpose.xlu0.b32.cont [4/16] %v1805, 128
      %2064 = vxpose.xlu0.b32.cont [5/16] %v1810, 128
      %2065 = vxpose.xlu0.b32.cont [6/16] %v1815, 128
      %2066 = vxpose.xlu0.b32.cont [7/16] %v1820, 128
      %2067 = vxpose.xlu0.b32.cont [8/16] %v1825, 128
      %2068 = vxpose.xlu0.b32.cont [9/16] %v1830, 128
      %2069 = vxpose.xlu0.b32.cont [10/16] %v1835, 128
      %2070 = vxpose.xlu0.b32.cont [11/16] %v1840, 128
      %2071 = vxpose.xlu0.b32.cont [12/16] %v1845, 128
      %2072 = vxpose.xlu0.b32.cont [13/16] %v1850, 128
      %2073 = vxpose.xlu0.b32.cont [14/16] %v1855, 128
      %2074 = vxpose.xlu0.b32.cont [15/16] %v1860, 128
      %2075 = vxpose.xlu0.b32.end [16/16] %v1865, 128
      %v2076 = vpop.trf.xlu0
      %v2077 = vpop.trf.xlu0
      %v2078 = vpop.trf.xlu0
      %v2079 = vpop.trf.xlu0
      %v2080 = vpop.trf.xlu0
      %v2081 = vpop.trf.xlu0
      %v2082 = vpop.trf.xlu0
      %v2083 = vpop.trf.xlu0
      %v2084 = vpop.trf.xlu0
      %v2085 = vpop.trf.xlu0
      %v2086 = vpop.trf.xlu0
      %v2087 = vpop.trf.xlu0
      %v2088 = vpop.trf.xlu0
      %v2089 = vpop.trf.xlu0
      %v2090 = vpop.trf.xlu0
      %v2091 = vpop.trf.xlu0
      %2092 = vxpose.xlu0.b32.start [1/16] %v1870, 128
      %2093 = vxpose.xlu0.b32.cont [2/16] %v1875, 128
      %2094 = vxpose.xlu0.b32.cont [3/16] %v1880, 128
      %2095 = vxpose.xlu0.b32.cont [4/16] %v1885, 128
      %2096 = vxpose.xlu0.b32.cont [5/16] %v1890, 128
      %2097 = vxpose.xlu0.b32.cont [6/16] %v1895, 128
      %2098 = vxpose.xlu0.b32.cont [7/16] %v1900, 128
      %2099 = vxpose.xlu0.b32.cont [8/16] %v1905, 128
      %2100 = vxpose.xlu0.b32.cont [9/16] %v1910, 128
      %2101 = vxpose.xlu0.b32.cont [10/16] %v1915, 128
      %2102 = vxpose.xlu0.b32.cont [11/16] %v1920, 128
      %2103 = vxpose.xlu0.b32.cont [12/16] %v1925, 128
      %2104 = vxpose.xlu0.b32.cont [13/16] %v1930, 128
      %2105 = vxpose.xlu0.b32.cont [14/16] %v1935, 128
      %2106 = vxpose.xlu0.b32.cont [15/16] %v1940, 128
      %2107 = vxpose.xlu0.b32.end [16/16] %v1945, 128
      %v2108 = vpop.trf.xlu0
      %v2109 = vpop.trf.xlu0
      %v2110 = vpop.trf.xlu0
      %v2111 = vpop.trf.xlu0
      %v2112 = vpop.trf.xlu0
      %v2113 = vpop.trf.xlu0
      %v2114 = vpop.trf.xlu0
      %v2115 = vpop.trf.xlu0
      %v2116 = vpop.trf.xlu0
      %v2117 = vpop.trf.xlu0
      %v2118 = vpop.trf.xlu0
      %v2119 = vpop.trf.xlu0
      %v2120 = vpop.trf.xlu0
      %v2121 = vpop.trf.xlu0
      %v2122 = vpop.trf.xlu0
      %v2123 = vpop.trf.xlu0
      %2124 = vxpose.xlu0.b32.start [1/16] %v1950, 128
      %2125 = vxpose.xlu0.b32.cont [2/16] %v1955, 128
      %2126 = vxpose.xlu0.b32.cont [3/16] %v1960, 128
      %2127 = vxpose.xlu0.b32.cont [4/16] %v1965, 128
      %2128 = vxpose.xlu0.b32.cont [5/16] %v1970, 128
      %2129 = vxpose.xlu0.b32.cont [6/16] %v1975, 128
      %2130 = vxpose.xlu0.b32.cont [7/16] %v1980, 128
      %2131 = vxpose.xlu0.b32.cont [8/16] %v1985, 128
      %2132 = vxpose.xlu0.b32.cont [9/16] %v1990, 128
      %2133 = vxpose.xlu0.b32.cont [10/16] %v1995, 128
      %2134 = vxpose.xlu0.b32.cont [11/16] %v2000, 128
      %2135 = vxpose.xlu0.b32.cont [12/16] %v2005, 128
      %2136 = vxpose.xlu0.b32.cont [13/16] %v2010, 128
      %2137 = vxpose.xlu0.b32.cont [14/16] %v2015, 128
      %2138 = vxpose.xlu0.b32.cont [15/16] %v2020, 128
      %2139 = vxpose.xlu0.b32.end [16/16] %v2025, 128
      %v2140 = vpop.trf.xlu0
      %v2141 = vpop.trf.xlu0
      %v2142 = vpop.trf.xlu0
      %v2143 = vpop.trf.xlu0
      %v2144 = vpop.trf.xlu0
      %v2145 = vpop.trf.xlu0
      %v2146 = vpop.trf.xlu0
      %v2147 = vpop.trf.xlu0
      %v2148 = vpop.trf.xlu0
      %v2149 = vpop.trf.xlu0
      %v2150 = vpop.trf.xlu0
      %v2151 = vpop.trf.xlu0
      %v2152 = vpop.trf.xlu0
      %v2153 = vpop.trf.xlu0
      %v2154 = vpop.trf.xlu0
      %v2155 = vpop.trf.xlu0
      %v2160 = vcombine.low %v2044, %v2076
      %v2161 = vcombine.low %v2108, %v2140
      %v2163 = vunpack.c.l.s4 1966171168
      %v2164 = vunpack.c.0.s8 %v2163
      %v2165 = vlaneseq
      %v2166 = vshrl.u32 %v2165, 7
      %v2167 = vsub.s32 %v2164, %v2166
      %v2168 = vrot.slane %v2160, %v2167
      %v2170 = vunpack.c.l.s4 1966171168
      %v2171 = vunpack.c.0.s8 %v2170
      %v2172 = vlaneseq
      %v2173 = vshrl.u32 %v2172, 7
      %v2174 = vsub.s32 %v2171, %v2173
      %v2175 = vrot.slane %v2161, %v2174
      %v2176 = vcombine.low %v2168, %v2175
      %v2178 = vunpack.c.l.s4 1966171168
      %v2179 = vunpack.c.0.s8 %v2178
      %v2180 = vlaneseq
      %v2181 = vshrl.u32 %v2180, 7
      %v2182 = vsub.s32 %v2179, %v2181
      %v2183 = vrot.slane %v2176, %v2182
      %v2185 = vlaneseq
      %vm2186 = vcmp.ge.s32.totalorder %v2185, 0
      %vm2187 = vcmp.lt.s32.totalorder %v2185, 512
      %vm2188 = vmand %vm2186, %vm2187
      %2189 = vst.msk [vmem:[%s251] sm:$0xf] %vm2188, %v2183
      %s2190 = smul.u32 4, %s17
      %p2191 = scmp.lt.s32.totalorder %s2190, 15
      %s2192 = scalar_select %p2191, %s2190, 15
      %s2193 = scalar_lea.vmem %s6, %s2192
      // Predicated region
      $region45: #{_forward_pallas.1} parent=43 // pred_check
        %p2194 = pneg %p166
      $region46: #{_forward_pallas.1} parent=43 // pred_check_branch
        %2196 = sbr.rel (%p2194) target = $region48
      $region47: #{_forward_pallas.1} parent=43 // pred_region
        %s2197 = smul.u32 4, %s17
      $region48: #{_forward_pallas.1} parent=43 // pred_fallthru
        _
    $region44: #{_forward_pallas.1} parent=5 // pred_fallthru
      _
    %p2198 = scmp.le.s32.totalorder 2, %s12
    // Predicated region
    $region49: #{_forward_pallas.1} parent=5 // pred_check
      %p2199 = pneg %p2198
    $region50: #{_forward_pallas.1} parent=5 // pred_check_branch
      %2201 = sbr.rel (%p2199) target = $region52
    $region51: #{_forward_pallas.1} parent=5 // pred_region
      %s2202 = ssub.s32 %s12, 2
      // Predicated region
      $region53: #{_forward_pallas.1} parent=51 // pred_check
        %p2203 = pneg %p172
      $region54: #{_forward_pallas.1} parent=51 // pred_check_branch
        %2205 = sbr.rel (%p2203) target = $region56
      $region55: #{_forward_pallas.1} parent=51 // pred_region
        %s2206 = smul.u32 4, %s18
        %p2207 = scmp.lt.s32.totalorder %s2206, 15
        %s2208 = scalar_select %p2207, %s2206, 15
        %s2209 = scalar_lea.vmem %s6, %s2208
      $region56: #{_forward_pallas.1} parent=51 // pred_fallthru
        _
    $region52: #{_forward_pallas.1} parent=5 // pred_fallthru
      _
  $region6: #{_forward_pallas.1} parent=0 // loop_footer
    %s16 = sadd.s32 1, %s12
  $region7: #{_forward_pallas.1} parent=0 // loop_footer_branch
    %11 = sbr.rel target = $region3
  $region8: #{_forward_pallas.1} parent=0 // loop_exit
    _

</llo_original>
